<compile_context>
chip_gen: v5e
topology: v5e:2x2
jax: 0.10.0
libtpu: 0.0.40
codegen_flags: <defaults>
</compile_context>

<pallas_src>
import functools

import jax
import jax.numpy as jnp
from jax.experimental import pallas as pl
from jax.experimental.pallas import tpu as pltpu  # noqa: F401  (TPU backend)


def _seq2seq_lstm_kernel(x_ref, wih_e_ref, whh_e_ref, be_ref,
                         wih_d_ref, whh_d_ref, bd_ref,
                         wl_ref, bl_ref,
                         out_ref,
                         *, seq_len, pred_len, hidden_size, n_features):
    """Fused encoder-LSTM -> autoregressive decoder-LSTM -> linear head.

    x_ref  : (B, T*F)  flattened encoder input (row-major => lane slices per t)
    out_ref: (B, P)    decoder predictions (trailing 1-dim added in wrapper)
    """
    H = hidden_size
    F = n_features
    B = x_ref.shape[0]

    # Every operand is read from VMEM exactly once (grid=() => single call).
    x2 = x_ref[...]            # (B, T*F)
    wih_e = wih_e_ref[...]     # (F, 4H)
    whh_e = whh_e_ref[...]     # (H, 4H)
    b_e = be_ref[...]          # (1, 4H)   pre-summed b_ih + b_hh
    wih_d = wih_d_ref[...]     # (1, 4H)   decoder input size is 1
    whh_d = whh_d_ref[...]     # (H, 4H)
    b_d = bd_ref[...]          # (1, 4H)
    w_l = wl_ref[...]          # (H, 1)    linear head, stored as a column
    b_l = bl_ref[...]          # (1, 1)

    def lstm_update(pre, c):
        # Two full-vreg EUP pushes over the packed (B, 4H) gate vector, then
        # cheap lane slices (PyTorch gate order: i, f, g, o).
        sig = jax.nn.sigmoid(pre)
        tnh = jnp.tanh(pre)
        i_g = sig[:, 0 * H:1 * H]
        f_g = sig[:, 1 * H:2 * H]
        g_g = tnh[:, 2 * H:3 * H]
        o_g = sig[:, 3 * H:4 * H]
        c_new = f_g * c + i_g * g_g
        h_new = o_g * jnp.tanh(c_new)
        return h_new, c_new

    # ------------------------- encoder -------------------------
    # The x_t @ W_ih products do not depend on the carry, so in the fully
    # unrolled loop the scheduler hoists them off the serial h-chain.
    h = jnp.zeros((B, H), jnp.float32)
    c = jnp.zeros((B, H), jnp.float32)
    for t in range(seq_len):                              # static unroll
        x_t = x2[:, t * F:(t + 1) * F]                    # (B, F) lane slice
        pre = (jnp.dot(x_t, wih_e, preferred_element_type=jnp.float32)
               + jnp.dot(h, whh_e, preferred_element_type=jnp.float32)
               + b_e)
        h, c = lstm_update(pre, c)

    # ------------------------- decoder -------------------------
    # Seed: x_enc[:, -1, 3]  -> lane slice of the flattened input.
    base = (seq_len - 1) * F + 3
    x0 = x2[:, base:base + 1]                             # (B, 1)

    # Fold Linear head + decoder input projection into the recurrence:
    #   x_i = h_{i-1} @ w_l + b_l  (i >= 1)
    #   => pre_i = h_{i-1} @ (w_hh_d + w_l w_ih_d) + (b_d + b_l * w_ih_d)
    whh_d_fold = whh_d + w_l * wih_d                      # (H,1)*(1,4H) -> (H,4H)
    b_d_fold = b_d + b_l * wih_d                          # (1,4H)

    ys = []
    for i in range(pred_len):                             # static unroll
        if i == 0:
            pre = (x0 * wih_d
                   + jnp.dot(h, whh_d, preferred_element_type=jnp.float32)
                   + b_d)
        else:
            pre = (jnp.dot(h, whh_d_fold, preferred_element_type=jnp.float32)
                   + b_d_fold)
        h, c = lstm_update(pre, c)
        # Output head: off the recurrence carry (never feeds the next step).
        ys.append(jnp.dot(h, w_l, preferred_element_type=jnp.float32) + b_l)

    # Single store of the whole prediction block in (B, P) layout.
    out_ref[...] = jnp.concatenate(ys, axis=1).astype(out_ref.dtype)


@functools.partial(jax.jit, static_argnames=("pred_len",))
def model_forward(x_enc, params, *, pred_len):
    """Mirror of Model.forward: x_enc (B, T, F) -> outputs (B, pred_len, 1)."""
    (w_ih_e, w_hh_e, b_e, w_ih_d, w_hh_d, b_d, w_l, b_l) = params
    B, T, F = x_enc.shape
    H = w_hh_e.shape[0]

    # Row-major flatten: zero-copy bitcast, lets the kernel take per-step
    # inputs (and the feature-3 decoder seed) as plain lane slices.
    x2 = x_enc.reshape(B, T * F)

    kernel = functools.partial(_seq2seq_lstm_kernel, seq_len=T,
                               pred_len=pred_len, hidden_size=H, n_features=F)

    flops = (2 * T * (B * F * 4 * H + B * H * 4 * H)
             + 2 * pred_len * (B * H * 4 * H + B * H + B * 4 * H))
    transcendentals = (T + pred_len) * (2 * B * 4 * H + B * H)
    bytes_accessed = 4 * (x2.size + w_ih_e.size + w_hh_e.size + b_e.size
                          + w_ih_d.size + w_hh_d.size + b_d.size
                          + w_l.size + b_l.size + B * pred_len)

    out_bp = pl.pallas_call(
        kernel,
        out_shape=jax.ShapeDtypeStruct((B, pred_len), jnp.float32),
        # grid=() : single invocation; every operand lands in VMEM once.
        cost_estimate=pl.CostEstimate(flops=flops,
                                      transcendentals=transcendentals,
                                      bytes_accessed=bytes_accessed),
    )(x2, w_ih_e, w_hh_e, b_e, w_ih_d, w_hh_d, b_d, w_l, b_l)

    # Trailing unit dim to match the module's (B, pred_len, 1); pure bitcast.
    return out_bp[:, :, None]


def init_model_params(key, n_features, hidden_size):
    """PyTorch-style uniform(-1/sqrt(H), 1/sqrt(H)) init, deterministic.

    Layout choices (made at init, not per call): W_ih -> (F, 4H), W_hh ->
    (H, 4H), Linear weight -> (H, 1) column; LSTM biases pre-summed.
    """
    H = hidden_size
    bound = 1.0 / float(H) ** 0.5
    ks = jax.random.split(key, 10)

    def u(k, shape):
        return jax.random.uniform(k, shape, jnp.float32, -bound, bound)

    w_ih_e = u(ks[0], (n_features, 4 * H))
    w_hh_e = u(ks[1], (H, 4 * H))
    b_e = u(ks[2], (1, 4 * H)) + u(ks[3], (1, 4 * H))     # b_ih + b_hh
    w_ih_d = u(ks[4], (1, 4 * H))
    w_hh_d = u(ks[5], (H, 4 * H))
    b_d = u(ks[6], (1, 4 * H)) + u(ks[7], (1, 4 * H))
    w_l = u(ks[8], (H, 1))
    b_l = u(ks[9], (1, 1))
    return (w_ih_e, w_hh_e, b_e, w_ih_d, w_hh_d, b_d, w_l, b_l)


def _reference_model(x_enc, params, pred_len):
    """Pure-JAX (XLA) reference of Model.forward for correctness checking."""
    (w_ih_e, w_hh_e, b_e, w_ih_d, w_hh_d, b_d, w_l, b_l) = params
    B, T, _ = x_enc.shape
    H = w_hh_e.shape[0]

    def cell(x_t, h, c, w_ih, w_hh, b):
        g = x_t @ w_ih + h @ w_hh + b
        i = jax.nn.sigmoid(g[:, 0 * H:1 * H])
        f = jax.nn.sigmoid(g[:, 1 * H:2 * H])
        gg = jnp.tanh(g[:, 2 * H:3 * H])
        o = jax.nn.sigmoid(g[:, 3 * H:4 * H])
        c = f * c + i * gg
        return o * jnp.tanh(c), c

    h = jnp.zeros((B, H), jnp.float32)
    c = jnp.zeros((B, H), jnp.float32)
    for t in range(T):
        h, c = cell(x_enc[:, t, :], h, c, w_ih_e, w_hh_e, b_e)

    x_in = x_enc[:, -1, 3:4]
    outs = []
    for _ in range(pred_len):
        h, c = cell(x_in, h, c, w_ih_d, w_hh_d, b_d)
        y = h @ w_l + b_l
        outs.append(y)
        x_in = y
    return jnp.stack(outs, axis=1)                        # (B, P, 1)


if __name__ == "__main__":
    # Model config (small, consistent with the PyTorch module):
    #   input_size (n_features) = 4, hidden_size = 32, pred_len = 12,
    #   batch_size = 2, encoder seq_len = 8.
    B, T, F, H, P = 2, 8, 4, 32, 12

    key = jax.random.PRNGKey(0)
    kx, kp = jax.random.split(key)
    x_enc = jax.random.normal(kx, (B, T, F), jnp.float32)  # (batch, seq, feat)
    params = init_model_params(kp, F, H)

    out = jax.block_until_ready(model_forward(x_enc, params, pred_len=P))
    assert out.shape == (B, P, 1), out.shape

    ref = _reference_model(x_enc, params, P)
    max_diff = float(jnp.max(jnp.abs(out - ref)))
    # All-f32 path: tight tolerance so any accidental precision regression
    # (bf16 casts, approx transcendentals) is caught.
    assert jnp.allclose(out, ref, atol=1e-4, rtol=1e-4), (
        f"output mismatch vs reference, max|diff|={max_diff}")
    print("KERNEL_OK")
</pallas_src>

<mosaic_0001>
module attributes {stable_mosaic.version = 11 : i64} {
  func.func @_seq2seq_lstm_kernel(%arg0: memref<2x32xf32, #tpu.memory_space<vmem>>, %arg1: memref<4x128xf32, #tpu.memory_space<vmem>>, %arg2: memref<32x128xf32, #tpu.memory_space<vmem>>, %arg3: memref<1x128xf32, #tpu.memory_space<vmem>>, %arg4: memref<1x128xf32, #tpu.memory_space<vmem>>, %arg5: memref<32x128xf32, #tpu.memory_space<vmem>>, %arg6: memref<1x128xf32, #tpu.memory_space<vmem>>, %arg7: memref<32x1xf32, #tpu.memory_space<vmem>>, %arg8: memref<1x1xf32, #tpu.memory_space<vmem>>, %arg9: memref<2x12xf32, #tpu.memory_space<vmem>>) attributes {dimension_semantics = [], scalar_prefetch = 0 : i64, scratch_operands = 0 : i64, tpu.core_type = #tpu.core_type<tc>} {
    %c0 = arith.constant 0 : index
    %c0_0 = arith.constant 0 : index
    %0 = vector.load %arg0[%c0, %c0_0] : memref<2x32xf32, #tpu.memory_space<vmem>>, vector<2x32xf32>
    %c0_1 = arith.constant 0 : index
    %c0_2 = arith.constant 0 : index
    %1 = vector.load %arg1[%c0_1, %c0_2] : memref<4x128xf32, #tpu.memory_space<vmem>>, vector<4x128xf32>
    %c0_3 = arith.constant 0 : index
    %c0_4 = arith.constant 0 : index
    %2 = vector.load %arg2[%c0_3, %c0_4] : memref<32x128xf32, #tpu.memory_space<vmem>>, vector<32x128xf32>
    %c0_5 = arith.constant 0 : index
    %c0_6 = arith.constant 0 : index
    %3 = vector.load %arg3[%c0_5, %c0_6] : memref<1x128xf32, #tpu.memory_space<vmem>>, vector<1x128xf32>
    %c0_7 = arith.constant 0 : index
    %c0_8 = arith.constant 0 : index
    %4 = vector.load %arg4[%c0_7, %c0_8] : memref<1x128xf32, #tpu.memory_space<vmem>>, vector<1x128xf32>
    %c0_9 = arith.constant 0 : index
    %c0_10 = arith.constant 0 : index
    %5 = vector.load %arg5[%c0_9, %c0_10] : memref<32x128xf32, #tpu.memory_space<vmem>>, vector<32x128xf32>
    %c0_11 = arith.constant 0 : index
    %c0_12 = arith.constant 0 : index
    %6 = vector.load %arg6[%c0_11, %c0_12] : memref<1x128xf32, #tpu.memory_space<vmem>>, vector<1x128xf32>
    %c0_13 = arith.constant 0 : index
    %c0_14 = arith.constant 0 : index
    %7 = vector.load %arg7[%c0_13, %c0_14] : memref<32x1xf32, #tpu.memory_space<vmem>>, vector<32x1xf32>
    %c0_15 = arith.constant 0 : index
    %c0_16 = arith.constant 0 : index
    %8 = vector.load %arg8[%c0_15, %c0_16] : memref<1x1xf32, #tpu.memory_space<vmem>>, vector<1x1xf32>
    %cst = arith.constant 0.000000e+00 : f32
    %9 = vector.broadcast %cst : f32 to vector<2x32xf32>
    %cst_17 = arith.constant 0.000000e+00 : f32
    %10 = vector.broadcast %cst_17 : f32 to vector<2x32xf32>
    %11 = vector.extract_strided_slice %0 {offsets = [0, 0], sizes = [2, 4], strides = [1, 1]} : vector<2x32xf32> to vector<2x4xf32>
    %cst_18 = arith.constant dense<0.000000e+00> : vector<2x128xf32>
    %12 = tpu.matmul %11, %1, %cst_18 {dimension_numbers = #tpu.dot_dimension_numbers<[1], [0], [0], [1], [0, 0, 1, 1], [], []>} : vector<2x4xf32>, vector<4x128xf32>, vector<2x128xf32> -> vector<2x128xf32>
    %cst_19 = arith.constant dense<0.000000e+00> : vector<2x128xf32>
    %13 = tpu.matmul %9, %2, %cst_19 {dimension_numbers = #tpu.dot_dimension_numbers<[1], [0], [0], [1], [0, 0, 1, 1], [], []>} : vector<2x32xf32>, vector<32x128xf32>, vector<2x128xf32> -> vector<2x128xf32>
    %14 = arith.addf %12, %13 : vector<2x128xf32>
    %15 = vector.broadcast %3 : vector<1x128xf32> to vector<2x128xf32>
    %16 = arith.addf %14, %15 : vector<2x128xf32>
    %17 = arith.negf %16 : vector<2x128xf32>
    %18 = math.exp %17 : vector<2x128xf32>
    %cst_20 = arith.constant 1.000000e+00 : f32
    %19 = vector.broadcast %cst_20 : f32 to vector<2x128xf32>
    %20 = arith.addf %19, %18 : vector<2x128xf32>
    %21 = arith.divf %19, %20 : vector<2x128xf32>
    %22 = math.tanh %16 : vector<2x128xf32>
    %23 = vector.extract_strided_slice %21 {offsets = [0, 0], sizes = [2, 32], strides = [1, 1]} : vector<2x128xf32> to vector<2x32xf32>
    %24 = vector.extract_strided_slice %21 {offsets = [0, 32], sizes = [2, 32], strides = [1, 1]} : vector<2x128xf32> to vector<2x32xf32>
    %25 = vector.extract_strided_slice %22 {offsets = [0, 64], sizes = [2, 32], strides = [1, 1]} : vector<2x128xf32> to vector<2x32xf32>
    %26 = vector.extract_strided_slice %21 {offsets = [0, 96], sizes = [2, 32], strides = [1, 1]} : vector<2x128xf32> to vector<2x32xf32>
    %27 = arith.mulf %24, %10 : vector<2x32xf32>
    %28 = arith.mulf %23, %25 : vector<2x32xf32>
    %29 = arith.addf %27, %28 : vector<2x32xf32>
    %30 = math.tanh %29 : vector<2x32xf32>
    %31 = arith.mulf %26, %30 : vector<2x32xf32>
    %32 = vector.extract_strided_slice %0 {offsets = [0, 4], sizes = [2, 4], strides = [1, 1]} : vector<2x32xf32> to vector<2x4xf32>
    %cst_21 = arith.constant dense<0.000000e+00> : vector<2x128xf32>
    %33 = tpu.matmul %32, %1, %cst_21 {dimension_numbers = #tpu.dot_dimension_numbers<[1], [0], [0], [1], [0, 0, 1, 1], [], []>} : vector<2x4xf32>, vector<4x128xf32>, vector<2x128xf32> -> vector<2x128xf32>
    %cst_22 = arith.constant dense<0.000000e+00> : vector<2x128xf32>
    %34 = tpu.matmul %31, %2, %cst_22 {dimension_numbers = #tpu.dot_dimension_numbers<[1], [0], [0], [1], [0, 0, 1, 1], [], []>} : vector<2x32xf32>, vector<32x128xf32>, vector<2x128xf32> -> vector<2x128xf32>
    %35 = arith.addf %33, %34 : vector<2x128xf32>
    %36 = vector.broadcast %3 : vector<1x128xf32> to vector<2x128xf32>
    %37 = arith.addf %35, %36 : vector<2x128xf32>
    %38 = arith.negf %37 : vector<2x128xf32>
    %39 = math.exp %38 : vector<2x128xf32>
    %cst_23 = arith.constant 1.000000e+00 : f32
    %40 = vector.broadcast %cst_23 : f32 to vector<2x128xf32>
    %41 = arith.addf %40, %39 : vector<2x128xf32>
    %42 = arith.divf %40, %41 : vector<2x128xf32>
    %43 = math.tanh %37 : vector<2x128xf32>
    %44 = vector.extract_strided_slice %42 {offsets = [0, 0], sizes = [2, 32], strides = [1, 1]} : vector<2x128xf32> to vector<2x32xf32>
    %45 = vector.extract_strided_slice %42 {offsets = [0, 32], sizes = [2, 32], strides = [1, 1]} : vector<2x128xf32> to vector<2x32xf32>
    %46 = vector.extract_strided_slice %43 {offsets = [0, 64], sizes = [2, 32], strides = [1, 1]} : vector<2x128xf32> to vector<2x32xf32>
    %47 = vector.extract_strided_slice %42 {offsets = [0, 96], sizes = [2, 32], strides = [1, 1]} : vector<2x128xf32> to vector<2x32xf32>
    %48 = arith.mulf %45, %29 : vector<2x32xf32>
    %49 = arith.mulf %44, %46 : vector<2x32xf32>
    %50 = arith.addf %48, %49 : vector<2x32xf32>
    %51 = math.tanh %50 : vector<2x32xf32>
    %52 = arith.mulf %47, %51 : vector<2x32xf32>
    %53 = vector.extract_strided_slice %0 {offsets = [0, 8], sizes = [2, 4], strides = [1, 1]} : vector<2x32xf32> to vector<2x4xf32>
    %cst_24 = arith.constant dense<0.000000e+00> : vector<2x128xf32>
    %54 = tpu.matmul %53, %1, %cst_24 {dimension_numbers = #tpu.dot_dimension_numbers<[1], [0], [0], [1], [0, 0, 1, 1], [], []>} : vector<2x4xf32>, vector<4x128xf32>, vector<2x128xf32> -> vector<2x128xf32>
    %cst_25 = arith.constant dense<0.000000e+00> : vector<2x128xf32>
    %55 = tpu.matmul %52, %2, %cst_25 {dimension_numbers = #tpu.dot_dimension_numbers<[1], [0], [0], [1], [0, 0, 1, 1], [], []>} : vector<2x32xf32>, vector<32x128xf32>, vector<2x128xf32> -> vector<2x128xf32>
    %56 = arith.addf %54, %55 : vector<2x128xf32>
    %57 = vector.broadcast %3 : vector<1x128xf32> to vector<2x128xf32>
    %58 = arith.addf %56, %57 : vector<2x128xf32>
    %59 = arith.negf %58 : vector<2x128xf32>
    %60 = math.exp %59 : vector<2x128xf32>
    %cst_26 = arith.constant 1.000000e+00 : f32
    %61 = vector.broadcast %cst_26 : f32 to vector<2x128xf32>
    %62 = arith.addf %61, %60 : vector<2x128xf32>
    %63 = arith.divf %61, %62 : vector<2x128xf32>
    %64 = math.tanh %58 : vector<2x128xf32>
    %65 = vector.extract_strided_slice %63 {offsets = [0, 0], sizes = [2, 32], strides = [1, 1]} : vector<2x128xf32> to vector<2x32xf32>
    %66 = vector.extract_strided_slice %63 {offsets = [0, 32], sizes = [2, 32], strides = [1, 1]} : vector<2x128xf32> to vector<2x32xf32>
    %67 = vector.extract_strided_slice %64 {offsets = [0, 64], sizes = [2, 32], strides = [1, 1]} : vector<2x128xf32> to vector<2x32xf32>
    %68 = vector.extract_strided_slice %63 {offsets = [0, 96], sizes = [2, 32], strides = [1, 1]} : vector<2x128xf32> to vector<2x32xf32>
    %69 = arith.mulf %66, %50 : vector<2x32xf32>
    %70 = arith.mulf %65, %67 : vector<2x32xf32>
    %71 = arith.addf %69, %70 : vector<2x32xf32>
    %72 = math.tanh %71 : vector<2x32xf32>
    %73 = arith.mulf %68, %72 : vector<2x32xf32>
    %74 = vector.extract_strided_slice %0 {offsets = [0, 12], sizes = [2, 4], strides = [1, 1]} : vector<2x32xf32> to vector<2x4xf32>
    %cst_27 = arith.constant dense<0.000000e+00> : vector<2x128xf32>
    %75 = tpu.matmul %74, %1, %cst_27 {dimension_numbers = #tpu.dot_dimension_numbers<[1], [0], [0], [1], [0, 0, 1, 1], [], []>} : vector<2x4xf32>, vector<4x128xf32>, vector<2x128xf32> -> vector<2x128xf32>
    %cst_28 = arith.constant dense<0.000000e+00> : vector<2x128xf32>
    %76 = tpu.matmul %73, %2, %cst_28 {dimension_numbers = #tpu.dot_dimension_numbers<[1], [0], [0], [1], [0, 0, 1, 1], [], []>} : vector<2x32xf32>, vector<32x128xf32>, vector<2x128xf32> -> vector<2x128xf32>
    %77 = arith.addf %75, %76 : vector<2x128xf32>
    %78 = vector.broadcast %3 : vector<1x128xf32> to vector<2x128xf32>
    %79 = arith.addf %77, %78 : vector<2x128xf32>
    %80 = arith.negf %79 : vector<2x128xf32>
    %81 = math.exp %80 : vector<2x128xf32>
    %cst_29 = arith.constant 1.000000e+00 : f32
    %82 = vector.broadcast %cst_29 : f32 to vector<2x128xf32>
    %83 = arith.addf %82, %81 : vector<2x128xf32>
    %84 = arith.divf %82, %83 : vector<2x128xf32>
    %85 = math.tanh %79 : vector<2x128xf32>
    %86 = vector.extract_strided_slice %84 {offsets = [0, 0], sizes = [2, 32], strides = [1, 1]} : vector<2x128xf32> to vector<2x32xf32>
    %87 = vector.extract_strided_slice %84 {offsets = [0, 32], sizes = [2, 32], strides = [1, 1]} : vector<2x128xf32> to vector<2x32xf32>
    %88 = vector.extract_strided_slice %85 {offsets = [0, 64], sizes = [2, 32], strides = [1, 1]} : vector<2x128xf32> to vector<2x32xf32>
    %89 = vector.extract_strided_slice %84 {offsets = [0, 96], sizes = [2, 32], strides = [1, 1]} : vector<2x128xf32> to vector<2x32xf32>
    %90 = arith.mulf %87, %71 : vector<2x32xf32>
    %91 = arith.mulf %86, %88 : vector<2x32xf32>
    %92 = arith.addf %90, %91 : vector<2x32xf32>
    %93 = math.tanh %92 : vector<2x32xf32>
    %94 = arith.mulf %89, %93 : vector<2x32xf32>
    %95 = vector.extract_strided_slice %0 {offsets = [0, 16], sizes = [2, 4], strides = [1, 1]} : vector<2x32xf32> to vector<2x4xf32>
    %cst_30 = arith.constant dense<0.000000e+00> : vector<2x128xf32>
    %96 = tpu.matmul %95, %1, %cst_30 {dimension_numbers = #tpu.dot_dimension_numbers<[1], [0], [0], [1], [0, 0, 1, 1], [], []>} : vector<2x4xf32>, vector<4x128xf32>, vector<2x128xf32> -> vector<2x128xf32>
    %cst_31 = arith.constant dense<0.000000e+00> : vector<2x128xf32>
    %97 = tpu.matmul %94, %2, %cst_31 {dimension_numbers = #tpu.dot_dimension_numbers<[1], [0], [0], [1], [0, 0, 1, 1], [], []>} : vector<2x32xf32>, vector<32x128xf32>, vector<2x128xf32> -> vector<2x128xf32>
    %98 = arith.addf %96, %97 : vector<2x128xf32>
    %99 = vector.broadcast %3 : vector<1x128xf32> to vector<2x128xf32>
    %100 = arith.addf %98, %99 : vector<2x128xf32>
    %101 = arith.negf %100 : vector<2x128xf32>
    %102 = math.exp %101 : vector<2x128xf32>
    %cst_32 = arith.constant 1.000000e+00 : f32
    %103 = vector.broadcast %cst_32 : f32 to vector<2x128xf32>
    %104 = arith.addf %103, %102 : vector<2x128xf32>
    %105 = arith.divf %103, %104 : vector<2x128xf32>
    %106 = math.tanh %100 : vector<2x128xf32>
    %107 = vector.extract_strided_slice %105 {offsets = [0, 0], sizes = [2, 32], strides = [1, 1]} : vector<2x128xf32> to vector<2x32xf32>
    %108 = vector.extract_strided_slice %105 {offsets = [0, 32], sizes = [2, 32], strides = [1, 1]} : vector<2x128xf32> to vector<2x32xf32>
    %109 = vector.extract_strided_slice %106 {offsets = [0, 64], sizes = [2, 32], strides = [1, 1]} : vector<2x128xf32> to vector<2x32xf32>
    %110 = vector.extract_strided_slice %105 {offsets = [0, 96], sizes = [2, 32], strides = [1, 1]} : vector<2x128xf32> to vector<2x32xf32>
    %111 = arith.mulf %108, %92 : vector<2x32xf32>
    %112 = arith.mulf %107, %109 : vector<2x32xf32>
    %113 = arith.addf %111, %112 : vector<2x32xf32>
    %114 = math.tanh %113 : vector<2x32xf32>
    %115 = arith.mulf %110, %114 : vector<2x32xf32>
    %116 = vector.extract_strided_slice %0 {offsets = [0, 20], sizes = [2, 4], strides = [1, 1]} : vector<2x32xf32> to vector<2x4xf32>
    %cst_33 = arith.constant dense<0.000000e+00> : vector<2x128xf32>
    %117 = tpu.matmul %116, %1, %cst_33 {dimension_numbers = #tpu.dot_dimension_numbers<[1], [0], [0], [1], [0, 0, 1, 1], [], []>} : vector<2x4xf32>, vector<4x128xf32>, vector<2x128xf32> -> vector<2x128xf32>
    %cst_34 = arith.constant dense<0.000000e+00> : vector<2x128xf32>
    %118 = tpu.matmul %115, %2, %cst_34 {dimension_numbers = #tpu.dot_dimension_numbers<[1], [0], [0], [1], [0, 0, 1, 1], [], []>} : vector<2x32xf32>, vector<32x128xf32>, vector<2x128xf32> -> vector<2x128xf32>
    %119 = arith.addf %117, %118 : vector<2x128xf32>
    %120 = vector.broadcast %3 : vector<1x128xf32> to vector<2x128xf32>
    %121 = arith.addf %119, %120 : vector<2x128xf32>
    %122 = arith.negf %121 : vector<2x128xf32>
    %123 = math.exp %122 : vector<2x128xf32>
    %cst_35 = arith.constant 1.000000e+00 : f32
    %124 = vector.broadcast %cst_35 : f32 to vector<2x128xf32>
    %125 = arith.addf %124, %123 : vector<2x128xf32>
    %126 = arith.divf %124, %125 : vector<2x128xf32>
    %127 = math.tanh %121 : vector<2x128xf32>
    %128 = vector.extract_strided_slice %126 {offsets = [0, 0], sizes = [2, 32], strides = [1, 1]} : vector<2x128xf32> to vector<2x32xf32>
    %129 = vector.extract_strided_slice %126 {offsets = [0, 32], sizes = [2, 32], strides = [1, 1]} : vector<2x128xf32> to vector<2x32xf32>
    %130 = vector.extract_strided_slice %127 {offsets = [0, 64], sizes = [2, 32], strides = [1, 1]} : vector<2x128xf32> to vector<2x32xf32>
    %131 = vector.extract_strided_slice %126 {offsets = [0, 96], sizes = [2, 32], strides = [1, 1]} : vector<2x128xf32> to vector<2x32xf32>
    %132 = arith.mulf %129, %113 : vector<2x32xf32>
    %133 = arith.mulf %128, %130 : vector<2x32xf32>
    %134 = arith.addf %132, %133 : vector<2x32xf32>
    %135 = math.tanh %134 : vector<2x32xf32>
    %136 = arith.mulf %131, %135 : vector<2x32xf32>
    %137 = vector.extract_strided_slice %0 {offsets = [0, 24], sizes = [2, 4], strides = [1, 1]} : vector<2x32xf32> to vector<2x4xf32>
    %cst_36 = arith.constant dense<0.000000e+00> : vector<2x128xf32>
    %138 = tpu.matmul %137, %1, %cst_36 {dimension_numbers = #tpu.dot_dimension_numbers<[1], [0], [0], [1], [0, 0, 1, 1], [], []>} : vector<2x4xf32>, vector<4x128xf32>, vector<2x128xf32> -> vector<2x128xf32>
    %cst_37 = arith.constant dense<0.000000e+00> : vector<2x128xf32>
    %139 = tpu.matmul %136, %2, %cst_37 {dimension_numbers = #tpu.dot_dimension_numbers<[1], [0], [0], [1], [0, 0, 1, 1], [], []>} : vector<2x32xf32>, vector<32x128xf32>, vector<2x128xf32> -> vector<2x128xf32>
    %140 = arith.addf %138, %139 : vector<2x128xf32>
    %141 = vector.broadcast %3 : vector<1x128xf32> to vector<2x128xf32>
    %142 = arith.addf %140, %141 : vector<2x128xf32>
    %143 = arith.negf %142 : vector<2x128xf32>
    %144 = math.exp %143 : vector<2x128xf32>
    %cst_38 = arith.constant 1.000000e+00 : f32
    %145 = vector.broadcast %cst_38 : f32 to vector<2x128xf32>
    %146 = arith.addf %145, %144 : vector<2x128xf32>
    %147 = arith.divf %145, %146 : vector<2x128xf32>
    %148 = math.tanh %142 : vector<2x128xf32>
    %149 = vector.extract_strided_slice %147 {offsets = [0, 0], sizes = [2, 32], strides = [1, 1]} : vector<2x128xf32> to vector<2x32xf32>
    %150 = vector.extract_strided_slice %147 {offsets = [0, 32], sizes = [2, 32], strides = [1, 1]} : vector<2x128xf32> to vector<2x32xf32>
    %151 = vector.extract_strided_slice %148 {offsets = [0, 64], sizes = [2, 32], strides = [1, 1]} : vector<2x128xf32> to vector<2x32xf32>
    %152 = vector.extract_strided_slice %147 {offsets = [0, 96], sizes = [2, 32], strides = [1, 1]} : vector<2x128xf32> to vector<2x32xf32>
    %153 = arith.mulf %150, %134 : vector<2x32xf32>
    %154 = arith.mulf %149, %151 : vector<2x32xf32>
    %155 = arith.addf %153, %154 : vector<2x32xf32>
    %156 = math.tanh %155 : vector<2x32xf32>
    %157 = arith.mulf %152, %156 : vector<2x32xf32>
    %158 = vector.extract_strided_slice %0 {offsets = [0, 28], sizes = [2, 4], strides = [1, 1]} : vector<2x32xf32> to vector<2x4xf32>
    %cst_39 = arith.constant dense<0.000000e+00> : vector<2x128xf32>
    %159 = tpu.matmul %158, %1, %cst_39 {dimension_numbers = #tpu.dot_dimension_numbers<[1], [0], [0], [1], [0, 0, 1, 1], [], []>} : vector<2x4xf32>, vector<4x128xf32>, vector<2x128xf32> -> vector<2x128xf32>
    %cst_40 = arith.constant dense<0.000000e+00> : vector<2x128xf32>
    %160 = tpu.matmul %157, %2, %cst_40 {dimension_numbers = #tpu.dot_dimension_numbers<[1], [0], [0], [1], [0, 0, 1, 1], [], []>} : vector<2x32xf32>, vector<32x128xf32>, vector<2x128xf32> -> vector<2x128xf32>
    %161 = arith.addf %159, %160 : vector<2x128xf32>
    %162 = vector.broadcast %3 : vector<1x128xf32> to vector<2x128xf32>
    %163 = arith.addf %161, %162 : vector<2x128xf32>
    %164 = arith.negf %163 : vector<2x128xf32>
    %165 = math.exp %164 : vector<2x128xf32>
    %cst_41 = arith.constant 1.000000e+00 : f32
    %166 = vector.broadcast %cst_41 : f32 to vector<2x128xf32>
    %167 = arith.addf %166, %165 : vector<2x128xf32>
    %168 = arith.divf %166, %167 : vector<2x128xf32>
    %169 = math.tanh %163 : vector<2x128xf32>
    %170 = vector.extract_strided_slice %168 {offsets = [0, 0], sizes = [2, 32], strides = [1, 1]} : vector<2x128xf32> to vector<2x32xf32>
    %171 = vector.extract_strided_slice %168 {offsets = [0, 32], sizes = [2, 32], strides = [1, 1]} : vector<2x128xf32> to vector<2x32xf32>
    %172 = vector.extract_strided_slice %169 {offsets = [0, 64], sizes = [2, 32], strides = [1, 1]} : vector<2x128xf32> to vector<2x32xf32>
    %173 = vector.extract_strided_slice %168 {offsets = [0, 96], sizes = [2, 32], strides = [1, 1]} : vector<2x128xf32> to vector<2x32xf32>
    %174 = arith.mulf %171, %155 : vector<2x32xf32>
    %175 = arith.mulf %170, %172 : vector<2x32xf32>
    %176 = arith.addf %174, %175 : vector<2x32xf32>
    %177 = math.tanh %176 : vector<2x32xf32>
    %178 = arith.mulf %173, %177 : vector<2x32xf32>
    %179 = vector.extract_strided_slice %0 {offsets = [0, 31], sizes = [2, 1], strides = [1, 1]} : vector<2x32xf32> to vector<2x1xf32>
    %180 = vector.broadcast %7 : vector<32x1xf32> to vector<32x128xf32>
    %181 = vector.broadcast %4 : vector<1x128xf32> to vector<32x128xf32>
    %182 = arith.mulf %180, %181 : vector<32x128xf32>
    %183 = arith.addf %5, %182 : vector<32x128xf32>
    %184 = vector.broadcast %8 : vector<1x1xf32> to vector<1x128xf32>
    %185 = arith.mulf %184, %4 : vector<1x128xf32>
    %186 = arith.addf %6, %185 : vector<1x128xf32>
    %187 = vector.broadcast %179 : vector<2x1xf32> to vector<2x128xf32>
    %188 = vector.broadcast %4 : vector<1x128xf32> to vector<2x128xf32>
    %189 = arith.mulf %187, %188 : vector<2x128xf32>
    %cst_42 = arith.constant dense<0.000000e+00> : vector<2x128xf32>
    %190 = tpu.matmul %178, %5, %cst_42 {dimension_numbers = #tpu.dot_dimension_numbers<[1], [0], [0], [1], [0, 0, 1, 1], [], []>} : vector<2x32xf32>, vector<32x128xf32>, vector<2x128xf32> -> vector<2x128xf32>
    %191 = arith.addf %189, %190 : vector<2x128xf32>
    %192 = vector.broadcast %6 : vector<1x128xf32> to vector<2x128xf32>
    %193 = arith.addf %191, %192 : vector<2x128xf32>
    %194 = arith.negf %193 : vector<2x128xf32>
    %195 = math.exp %194 : vector<2x128xf32>
    %cst_43 = arith.constant 1.000000e+00 : f32
    %196 = vector.broadcast %cst_43 : f32 to vector<2x128xf32>
    %197 = arith.addf %196, %195 : vector<2x128xf32>
    %198 = arith.divf %196, %197 : vector<2x128xf32>
    %199 = math.tanh %193 : vector<2x128xf32>
    %200 = vector.extract_strided_slice %198 {offsets = [0, 0], sizes = [2, 32], strides = [1, 1]} : vector<2x128xf32> to vector<2x32xf32>
    %201 = vector.extract_strided_slice %198 {offsets = [0, 32], sizes = [2, 32], strides = [1, 1]} : vector<2x128xf32> to vector<2x32xf32>
    %202 = vector.extract_strided_slice %199 {offsets = [0, 64], sizes = [2, 32], strides = [1, 1]} : vector<2x128xf32> to vector<2x32xf32>
    %203 = vector.extract_strided_slice %198 {offsets = [0, 96], sizes = [2, 32], strides = [1, 1]} : vector<2x128xf32> to vector<2x32xf32>
    %204 = arith.mulf %201, %176 : vector<2x32xf32>
    %205 = arith.mulf %200, %202 : vector<2x32xf32>
    %206 = arith.addf %204, %205 : vector<2x32xf32>
    %207 = math.tanh %206 : vector<2x32xf32>
    %208 = arith.mulf %203, %207 : vector<2x32xf32>
    %cst_44 = arith.constant dense<0.000000e+00> : vector<2x1xf32>
    %209 = tpu.matmul %208, %7, %cst_44 {dimension_numbers = #tpu.dot_dimension_numbers<[1], [0], [0], [1], [0, 0, 1, 1], [], []>} : vector<2x32xf32>, vector<32x1xf32>, vector<2x1xf32> -> vector<2x1xf32>
    %210 = vector.broadcast %8 : vector<1x1xf32> to vector<2x1xf32>
    %211 = arith.addf %209, %210 : vector<2x1xf32>
    %cst_45 = arith.constant dense<0.000000e+00> : vector<2x128xf32>
    %212 = tpu.matmul %208, %183, %cst_45 {dimension_numbers = #tpu.dot_dimension_numbers<[1], [0], [0], [1], [0, 0, 1, 1], [], []>} : vector<2x32xf32>, vector<32x128xf32>, vector<2x128xf32> -> vector<2x128xf32>
    %213 = vector.broadcast %186 : vector<1x128xf32> to vector<2x128xf32>
    %214 = arith.addf %212, %213 : vector<2x128xf32>
    %215 = arith.negf %214 : vector<2x128xf32>
    %216 = math.exp %215 : vector<2x128xf32>
    %cst_46 = arith.constant 1.000000e+00 : f32
    %217 = vector.broadcast %cst_46 : f32 to vector<2x128xf32>
    %218 = arith.addf %217, %216 : vector<2x128xf32>
    %219 = arith.divf %217, %218 : vector<2x128xf32>
    %220 = math.tanh %214 : vector<2x128xf32>
    %221 = vector.extract_strided_slice %219 {offsets = [0, 0], sizes = [2, 32], strides = [1, 1]} : vector<2x128xf32> to vector<2x32xf32>
    %222 = vector.extract_strided_slice %219 {offsets = [0, 32], sizes = [2, 32], strides = [1, 1]} : vector<2x128xf32> to vector<2x32xf32>
    %223 = vector.extract_strided_slice %220 {offsets = [0, 64], sizes = [2, 32], strides = [1, 1]} : vector<2x128xf32> to vector<2x32xf32>
    %224 = vector.extract_strided_slice %219 {offsets = [0, 96], sizes = [2, 32], strides = [1, 1]} : vector<2x128xf32> to vector<2x32xf32>
    %225 = arith.mulf %222, %206 : vector<2x32xf32>
    %226 = arith.mulf %221, %223 : vector<2x32xf32>
    %227 = arith.addf %225, %226 : vector<2x32xf32>
    %228 = math.tanh %227 : vector<2x32xf32>
    %229 = arith.mulf %224, %228 : vector<2x32xf32>
    %cst_47 = arith.constant dense<0.000000e+00> : vector<2x1xf32>
    %230 = tpu.matmul %229, %7, %cst_47 {dimension_numbers = #tpu.dot_dimension_numbers<[1], [0], [0], [1], [0, 0, 1, 1], [], []>} : vector<2x32xf32>, vector<32x1xf32>, vector<2x1xf32> -> vector<2x1xf32>
    %231 = vector.broadcast %8 : vector<1x1xf32> to vector<2x1xf32>
    %232 = arith.addf %230, %231 : vector<2x1xf32>
    %cst_48 = arith.constant dense<0.000000e+00> : vector<2x128xf32>
    %233 = tpu.matmul %229, %183, %cst_48 {dimension_numbers = #tpu.dot_dimension_numbers<[1], [0], [0], [1], [0, 0, 1, 1], [], []>} : vector<2x32xf32>, vector<32x128xf32>, vector<2x128xf32> -> vector<2x128xf32>
    %234 = vector.broadcast %186 : vector<1x128xf32> to vector<2x128xf32>
    %235 = arith.addf %233, %234 : vector<2x128xf32>
    %236 = arith.negf %235 : vector<2x128xf32>
    %237 = math.exp %236 : vector<2x128xf32>
    %cst_49 = arith.constant 1.000000e+00 : f32
    %238 = vector.broadcast %cst_49 : f32 to vector<2x128xf32>
    %239 = arith.addf %238, %237 : vector<2x128xf32>
    %240 = arith.divf %238, %239 : vector<2x128xf32>
    %241 = math.tanh %235 : vector<2x128xf32>
    %242 = vector.extract_strided_slice %240 {offsets = [0, 0], sizes = [2, 32], strides = [1, 1]} : vector<2x128xf32> to vector<2x32xf32>
    %243 = vector.extract_strided_slice %240 {offsets = [0, 32], sizes = [2, 32], strides = [1, 1]} : vector<2x128xf32> to vector<2x32xf32>
    %244 = vector.extract_strided_slice %241 {offsets = [0, 64], sizes = [2, 32], strides = [1, 1]} : vector<2x128xf32> to vector<2x32xf32>
    %245 = vector.extract_strided_slice %240 {offsets = [0, 96], sizes = [2, 32], strides = [1, 1]} : vector<2x128xf32> to vector<2x32xf32>
    %246 = arith.mulf %243, %227 : vector<2x32xf32>
    %247 = arith.mulf %242, %244 : vector<2x32xf32>
    %248 = arith.addf %246, %247 : vector<2x32xf32>
    %249 = math.tanh %248 : vector<2x32xf32>
    %250 = arith.mulf %245, %249 : vector<2x32xf32>
    %cst_50 = arith.constant dense<0.000000e+00> : vector<2x1xf32>
    %251 = tpu.matmul %250, %7, %cst_50 {dimension_numbers = #tpu.dot_dimension_numbers<[1], [0], [0], [1], [0, 0, 1, 1], [], []>} : vector<2x32xf32>, vector<32x1xf32>, vector<2x1xf32> -> vector<2x1xf32>
    %252 = vector.broadcast %8 : vector<1x1xf32> to vector<2x1xf32>
    %253 = arith.addf %251, %252 : vector<2x1xf32>
    %cst_51 = arith.constant dense<0.000000e+00> : vector<2x128xf32>
    %254 = tpu.matmul %250, %183, %cst_51 {dimension_numbers = #tpu.dot_dimension_numbers<[1], [0], [0], [1], [0, 0, 1, 1], [], []>} : vector<2x32xf32>, vector<32x128xf32>, vector<2x128xf32> -> vector<2x128xf32>
    %255 = vector.broadcast %186 : vector<1x128xf32> to vector<2x128xf32>
    %256 = arith.addf %254, %255 : vector<2x128xf32>
    %257 = arith.negf %256 : vector<2x128xf32>
    %258 = math.exp %257 : vector<2x128xf32>
    %cst_52 = arith.constant 1.000000e+00 : f32
    %259 = vector.broadcast %cst_52 : f32 to vector<2x128xf32>
    %260 = arith.addf %259, %258 : vector<2x128xf32>
    %261 = arith.divf %259, %260 : vector<2x128xf32>
    %262 = math.tanh %256 : vector<2x128xf32>
    %263 = vector.extract_strided_slice %261 {offsets = [0, 0], sizes = [2, 32], strides = [1, 1]} : vector<2x128xf32> to vector<2x32xf32>
    %264 = vector.extract_strided_slice %261 {offsets = [0, 32], sizes = [2, 32], strides = [1, 1]} : vector<2x128xf32> to vector<2x32xf32>
    %265 = vector.extract_strided_slice %262 {offsets = [0, 64], sizes = [2, 32], strides = [1, 1]} : vector<2x128xf32> to vector<2x32xf32>
    %266 = vector.extract_strided_slice %261 {offsets = [0, 96], sizes = [2, 32], strides = [1, 1]} : vector<2x128xf32> to vector<2x32xf32>
    %267 = arith.mulf %264, %248 : vector<2x32xf32>
    %268 = arith.mulf %263, %265 : vector<2x32xf32>
    %269 = arith.addf %267, %268 : vector<2x32xf32>
    %270 = math.tanh %269 : vector<2x32xf32>
    %271 = arith.mulf %266, %270 : vector<2x32xf32>
    %cst_53 = arith.constant dense<0.000000e+00> : vector<2x1xf32>
    %272 = tpu.matmul %271, %7, %cst_53 {dimension_numbers = #tpu.dot_dimension_numbers<[1], [0], [0], [1], [0, 0, 1, 1], [], []>} : vector<2x32xf32>, vector<32x1xf32>, vector<2x1xf32> -> vector<2x1xf32>
    %273 = vector.broadcast %8 : vector<1x1xf32> to vector<2x1xf32>
    %274 = arith.addf %272, %273 : vector<2x1xf32>
    %cst_54 = arith.constant dense<0.000000e+00> : vector<2x128xf32>
    %275 = tpu.matmul %271, %183, %cst_54 {dimension_numbers = #tpu.dot_dimension_numbers<[1], [0], [0], [1], [0, 0, 1, 1], [], []>} : vector<2x32xf32>, vector<32x128xf32>, vector<2x128xf32> -> vector<2x128xf32>
    %276 = vector.broadcast %186 : vector<1x128xf32> to vector<2x128xf32>
    %277 = arith.addf %275, %276 : vector<2x128xf32>
    %278 = arith.negf %277 : vector<2x128xf32>
    %279 = math.exp %278 : vector<2x128xf32>
    %cst_55 = arith.constant 1.000000e+00 : f32
    %280 = vector.broadcast %cst_55 : f32 to vector<2x128xf32>
    %281 = arith.addf %280, %279 : vector<2x128xf32>
    %282 = arith.divf %280, %281 : vector<2x128xf32>
    %283 = math.tanh %277 : vector<2x128xf32>
    %284 = vector.extract_strided_slice %282 {offsets = [0, 0], sizes = [2, 32], strides = [1, 1]} : vector<2x128xf32> to vector<2x32xf32>
    %285 = vector.extract_strided_slice %282 {offsets = [0, 32], sizes = [2, 32], strides = [1, 1]} : vector<2x128xf32> to vector<2x32xf32>
    %286 = vector.extract_strided_slice %283 {offsets = [0, 64], sizes = [2, 32], strides = [1, 1]} : vector<2x128xf32> to vector<2x32xf32>
    %287 = vector.extract_strided_slice %282 {offsets = [0, 96], sizes = [2, 32], strides = [1, 1]} : vector<2x128xf32> to vector<2x32xf32>
    %288 = arith.mulf %285, %269 : vector<2x32xf32>
    %289 = arith.mulf %284, %286 : vector<2x32xf32>
    %290 = arith.addf %288, %289 : vector<2x32xf32>
    %291 = math.tanh %290 : vector<2x32xf32>
    %292 = arith.mulf %287, %291 : vector<2x32xf32>
    %cst_56 = arith.constant dense<0.000000e+00> : vector<2x1xf32>
    %293 = tpu.matmul %292, %7, %cst_56 {dimension_numbers = #tpu.dot_dimension_numbers<[1], [0], [0], [1], [0, 0, 1, 1], [], []>} : vector<2x32xf32>, vector<32x1xf32>, vector<2x1xf32> -> vector<2x1xf32>
    %294 = vector.broadcast %8 : vector<1x1xf32> to vector<2x1xf32>
    %295 = arith.addf %293, %294 : vector<2x1xf32>
    %cst_57 = arith.constant dense<0.000000e+00> : vector<2x128xf32>
    %296 = tpu.matmul %292, %183, %cst_57 {dimension_numbers = #tpu.dot_dimension_numbers<[1], [0], [0], [1], [0, 0, 1, 1], [], []>} : vector<2x32xf32>, vector<32x128xf32>, vector<2x128xf32> -> vector<2x128xf32>
    %297 = vector.broadcast %186 : vector<1x128xf32> to vector<2x128xf32>
    %298 = arith.addf %296, %297 : vector<2x128xf32>
    %299 = arith.negf %298 : vector<2x128xf32>
    %300 = math.exp %299 : vector<2x128xf32>
    %cst_58 = arith.constant 1.000000e+00 : f32
    %301 = vector.broadcast %cst_58 : f32 to vector<2x128xf32>
    %302 = arith.addf %301, %300 : vector<2x128xf32>
    %303 = arith.divf %301, %302 : vector<2x128xf32>
    %304 = math.tanh %298 : vector<2x128xf32>
    %305 = vector.extract_strided_slice %303 {offsets = [0, 0], sizes = [2, 32], strides = [1, 1]} : vector<2x128xf32> to vector<2x32xf32>
    %306 = vector.extract_strided_slice %303 {offsets = [0, 32], sizes = [2, 32], strides = [1, 1]} : vector<2x128xf32> to vector<2x32xf32>
    %307 = vector.extract_strided_slice %304 {offsets = [0, 64], sizes = [2, 32], strides = [1, 1]} : vector<2x128xf32> to vector<2x32xf32>
    %308 = vector.extract_strided_slice %303 {offsets = [0, 96], sizes = [2, 32], strides = [1, 1]} : vector<2x128xf32> to vector<2x32xf32>
    %309 = arith.mulf %306, %290 : vector<2x32xf32>
    %310 = arith.mulf %305, %307 : vector<2x32xf32>
    %311 = arith.addf %309, %310 : vector<2x32xf32>
    %312 = math.tanh %311 : vector<2x32xf32>
    %313 = arith.mulf %308, %312 : vector<2x32xf32>
    %cst_59 = arith.constant dense<0.000000e+00> : vector<2x1xf32>
    %314 = tpu.matmul %313, %7, %cst_59 {dimension_numbers = #tpu.dot_dimension_numbers<[1], [0], [0], [1], [0, 0, 1, 1], [], []>} : vector<2x32xf32>, vector<32x1xf32>, vector<2x1xf32> -> vector<2x1xf32>
    %315 = vector.broadcast %8 : vector<1x1xf32> to vector<2x1xf32>
    %316 = arith.addf %314, %315 : vector<2x1xf32>
    %cst_60 = arith.constant dense<0.000000e+00> : vector<2x128xf32>
    %317 = tpu.matmul %313, %183, %cst_60 {dimension_numbers = #tpu.dot_dimension_numbers<[1], [0], [0], [1], [0, 0, 1, 1], [], []>} : vector<2x32xf32>, vector<32x128xf32>, vector<2x128xf32> -> vector<2x128xf32>
    %318 = vector.broadcast %186 : vector<1x128xf32> to vector<2x128xf32>
    %319 = arith.addf %317, %318 : vector<2x128xf32>
    %320 = arith.negf %319 : vector<2x128xf32>
    %321 = math.exp %320 : vector<2x128xf32>
    %cst_61 = arith.constant 1.000000e+00 : f32
    %322 = vector.broadcast %cst_61 : f32 to vector<2x128xf32>
    %323 = arith.addf %322, %321 : vector<2x128xf32>
    %324 = arith.divf %322, %323 : vector<2x128xf32>
    %325 = math.tanh %319 : vector<2x128xf32>
    %326 = vector.extract_strided_slice %324 {offsets = [0, 0], sizes = [2, 32], strides = [1, 1]} : vector<2x128xf32> to vector<2x32xf32>
    %327 = vector.extract_strided_slice %324 {offsets = [0, 32], sizes = [2, 32], strides = [1, 1]} : vector<2x128xf32> to vector<2x32xf32>
    %328 = vector.extract_strided_slice %325 {offsets = [0, 64], sizes = [2, 32], strides = [1, 1]} : vector<2x128xf32> to vector<2x32xf32>
    %329 = vector.extract_strided_slice %324 {offsets = [0, 96], sizes = [2, 32], strides = [1, 1]} : vector<2x128xf32> to vector<2x32xf32>
    %330 = arith.mulf %327, %311 : vector<2x32xf32>
    %331 = arith.mulf %326, %328 : vector<2x32xf32>
    %332 = arith.addf %330, %331 : vector<2x32xf32>
    %333 = math.tanh %332 : vector<2x32xf32>
    %334 = arith.mulf %329, %333 : vector<2x32xf32>
    %cst_62 = arith.constant dense<0.000000e+00> : vector<2x1xf32>
    %335 = tpu.matmul %334, %7, %cst_62 {dimension_numbers = #tpu.dot_dimension_numbers<[1], [0], [0], [1], [0, 0, 1, 1], [], []>} : vector<2x32xf32>, vector<32x1xf32>, vector<2x1xf32> -> vector<2x1xf32>
    %336 = vector.broadcast %8 : vector<1x1xf32> to vector<2x1xf32>
    %337 = arith.addf %335, %336 : vector<2x1xf32>
    %cst_63 = arith.constant dense<0.000000e+00> : vector<2x128xf32>
    %338 = tpu.matmul %334, %183, %cst_63 {dimension_numbers = #tpu.dot_dimension_numbers<[1], [0], [0], [1], [0, 0, 1, 1], [], []>} : vector<2x32xf32>, vector<32x128xf32>, vector<2x128xf32> -> vector<2x128xf32>
    %339 = vector.broadcast %186 : vector<1x128xf32> to vector<2x128xf32>
    %340 = arith.addf %338, %339 : vector<2x128xf32>
    %341 = arith.negf %340 : vector<2x128xf32>
    %342 = math.exp %341 : vector<2x128xf32>
    %cst_64 = arith.constant 1.000000e+00 : f32
    %343 = vector.broadcast %cst_64 : f32 to vector<2x128xf32>
    %344 = arith.addf %343, %342 : vector<2x128xf32>
    %345 = arith.divf %343, %344 : vector<2x128xf32>
    %346 = math.tanh %340 : vector<2x128xf32>
    %347 = vector.extract_strided_slice %345 {offsets = [0, 0], sizes = [2, 32], strides = [1, 1]} : vector<2x128xf32> to vector<2x32xf32>
    %348 = vector.extract_strided_slice %345 {offsets = [0, 32], sizes = [2, 32], strides = [1, 1]} : vector<2x128xf32> to vector<2x32xf32>
    %349 = vector.extract_strided_slice %346 {offsets = [0, 64], sizes = [2, 32], strides = [1, 1]} : vector<2x128xf32> to vector<2x32xf32>
    %350 = vector.extract_strided_slice %345 {offsets = [0, 96], sizes = [2, 32], strides = [1, 1]} : vector<2x128xf32> to vector<2x32xf32>
    %351 = arith.mulf %348, %332 : vector<2x32xf32>
    %352 = arith.mulf %347, %349 : vector<2x32xf32>
    %353 = arith.addf %351, %352 : vector<2x32xf32>
    %354 = math.tanh %353 : vector<2x32xf32>
    %355 = arith.mulf %350, %354 : vector<2x32xf32>
    %cst_65 = arith.constant dense<0.000000e+00> : vector<2x1xf32>
    %356 = tpu.matmul %355, %7, %cst_65 {dimension_numbers = #tpu.dot_dimension_numbers<[1], [0], [0], [1], [0, 0, 1, 1], [], []>} : vector<2x32xf32>, vector<32x1xf32>, vector<2x1xf32> -> vector<2x1xf32>
    %357 = vector.broadcast %8 : vector<1x1xf32> to vector<2x1xf32>
    %358 = arith.addf %356, %357 : vector<2x1xf32>
    %cst_66 = arith.constant dense<0.000000e+00> : vector<2x128xf32>
    %359 = tpu.matmul %355, %183, %cst_66 {dimension_numbers = #tpu.dot_dimension_numbers<[1], [0], [0], [1], [0, 0, 1, 1], [], []>} : vector<2x32xf32>, vector<32x128xf32>, vector<2x128xf32> -> vector<2x128xf32>
    %360 = vector.broadcast %186 : vector<1x128xf32> to vector<2x128xf32>
    %361 = arith.addf %359, %360 : vector<2x128xf32>
    %362 = arith.negf %361 : vector<2x128xf32>
    %363 = math.exp %362 : vector<2x128xf32>
    %cst_67 = arith.constant 1.000000e+00 : f32
    %364 = vector.broadcast %cst_67 : f32 to vector<2x128xf32>
    %365 = arith.addf %364, %363 : vector<2x128xf32>
    %366 = arith.divf %364, %365 : vector<2x128xf32>
    %367 = math.tanh %361 : vector<2x128xf32>
    %368 = vector.extract_strided_slice %366 {offsets = [0, 0], sizes = [2, 32], strides = [1, 1]} : vector<2x128xf32> to vector<2x32xf32>
    %369 = vector.extract_strided_slice %366 {offsets = [0, 32], sizes = [2, 32], strides = [1, 1]} : vector<2x128xf32> to vector<2x32xf32>
    %370 = vector.extract_strided_slice %367 {offsets = [0, 64], sizes = [2, 32], strides = [1, 1]} : vector<2x128xf32> to vector<2x32xf32>
    %371 = vector.extract_strided_slice %366 {offsets = [0, 96], sizes = [2, 32], strides = [1, 1]} : vector<2x128xf32> to vector<2x32xf32>
    %372 = arith.mulf %369, %353 : vector<2x32xf32>
    %373 = arith.mulf %368, %370 : vector<2x32xf32>
    %374 = arith.addf %372, %373 : vector<2x32xf32>
    %375 = math.tanh %374 : vector<2x32xf32>
    %376 = arith.mulf %371, %375 : vector<2x32xf32>
    %cst_68 = arith.constant dense<0.000000e+00> : vector<2x1xf32>
    %377 = tpu.matmul %376, %7, %cst_68 {dimension_numbers = #tpu.dot_dimension_numbers<[1], [0], [0], [1], [0, 0, 1, 1], [], []>} : vector<2x32xf32>, vector<32x1xf32>, vector<2x1xf32> -> vector<2x1xf32>
    %378 = vector.broadcast %8 : vector<1x1xf32> to vector<2x1xf32>
    %379 = arith.addf %377, %378 : vector<2x1xf32>
    %cst_69 = arith.constant dense<0.000000e+00> : vector<2x128xf32>
    %380 = tpu.matmul %376, %183, %cst_69 {dimension_numbers = #tpu.dot_dimension_numbers<[1], [0], [0], [1], [0, 0, 1, 1], [], []>} : vector<2x32xf32>, vector<32x128xf32>, vector<2x128xf32> -> vector<2x128xf32>
    %381 = vector.broadcast %186 : vector<1x128xf32> to vector<2x128xf32>
    %382 = arith.addf %380, %381 : vector<2x128xf32>
    %383 = arith.negf %382 : vector<2x128xf32>
    %384 = math.exp %383 : vector<2x128xf32>
    %cst_70 = arith.constant 1.000000e+00 : f32
    %385 = vector.broadcast %cst_70 : f32 to vector<2x128xf32>
    %386 = arith.addf %385, %384 : vector<2x128xf32>
    %387 = arith.divf %385, %386 : vector<2x128xf32>
    %388 = math.tanh %382 : vector<2x128xf32>
    %389 = vector.extract_strided_slice %387 {offsets = [0, 0], sizes = [2, 32], strides = [1, 1]} : vector<2x128xf32> to vector<2x32xf32>
    %390 = vector.extract_strided_slice %387 {offsets = [0, 32], sizes = [2, 32], strides = [1, 1]} : vector<2x128xf32> to vector<2x32xf32>
    %391 = vector.extract_strided_slice %388 {offsets = [0, 64], sizes = [2, 32], strides = [1, 1]} : vector<2x128xf32> to vector<2x32xf32>
    %392 = vector.extract_strided_slice %387 {offsets = [0, 96], sizes = [2, 32], strides = [1, 1]} : vector<2x128xf32> to vector<2x32xf32>
    %393 = arith.mulf %390, %374 : vector<2x32xf32>
    %394 = arith.mulf %389, %391 : vector<2x32xf32>
    %395 = arith.addf %393, %394 : vector<2x32xf32>
    %396 = math.tanh %395 : vector<2x32xf32>
    %397 = arith.mulf %392, %396 : vector<2x32xf32>
    %cst_71 = arith.constant dense<0.000000e+00> : vector<2x1xf32>
    %398 = tpu.matmul %397, %7, %cst_71 {dimension_numbers = #tpu.dot_dimension_numbers<[1], [0], [0], [1], [0, 0, 1, 1], [], []>} : vector<2x32xf32>, vector<32x1xf32>, vector<2x1xf32> -> vector<2x1xf32>
    %399 = vector.broadcast %8 : vector<1x1xf32> to vector<2x1xf32>
    %400 = arith.addf %398, %399 : vector<2x1xf32>
    %cst_72 = arith.constant dense<0.000000e+00> : vector<2x128xf32>
    %401 = tpu.matmul %397, %183, %cst_72 {dimension_numbers = #tpu.dot_dimension_numbers<[1], [0], [0], [1], [0, 0, 1, 1], [], []>} : vector<2x32xf32>, vector<32x128xf32>, vector<2x128xf32> -> vector<2x128xf32>
    %402 = vector.broadcast %186 : vector<1x128xf32> to vector<2x128xf32>
    %403 = arith.addf %401, %402 : vector<2x128xf32>
    %404 = arith.negf %403 : vector<2x128xf32>
    %405 = math.exp %404 : vector<2x128xf32>
    %cst_73 = arith.constant 1.000000e+00 : f32
    %406 = vector.broadcast %cst_73 : f32 to vector<2x128xf32>
    %407 = arith.addf %406, %405 : vector<2x128xf32>
    %408 = arith.divf %406, %407 : vector<2x128xf32>
    %409 = math.tanh %403 : vector<2x128xf32>
    %410 = vector.extract_strided_slice %408 {offsets = [0, 0], sizes = [2, 32], strides = [1, 1]} : vector<2x128xf32> to vector<2x32xf32>
    %411 = vector.extract_strided_slice %408 {offsets = [0, 32], sizes = [2, 32], strides = [1, 1]} : vector<2x128xf32> to vector<2x32xf32>
    %412 = vector.extract_strided_slice %409 {offsets = [0, 64], sizes = [2, 32], strides = [1, 1]} : vector<2x128xf32> to vector<2x32xf32>
    %413 = vector.extract_strided_slice %408 {offsets = [0, 96], sizes = [2, 32], strides = [1, 1]} : vector<2x128xf32> to vector<2x32xf32>
    %414 = arith.mulf %411, %395 : vector<2x32xf32>
    %415 = arith.mulf %410, %412 : vector<2x32xf32>
    %416 = arith.addf %414, %415 : vector<2x32xf32>
    %417 = math.tanh %416 : vector<2x32xf32>
    %418 = arith.mulf %413, %417 : vector<2x32xf32>
    %cst_74 = arith.constant dense<0.000000e+00> : vector<2x1xf32>
    %419 = tpu.matmul %418, %7, %cst_74 {dimension_numbers = #tpu.dot_dimension_numbers<[1], [0], [0], [1], [0, 0, 1, 1], [], []>} : vector<2x32xf32>, vector<32x1xf32>, vector<2x1xf32> -> vector<2x1xf32>
    %420 = vector.broadcast %8 : vector<1x1xf32> to vector<2x1xf32>
    %421 = arith.addf %419, %420 : vector<2x1xf32>
    %cst_75 = arith.constant dense<0.000000e+00> : vector<2x128xf32>
    %422 = tpu.matmul %418, %183, %cst_75 {dimension_numbers = #tpu.dot_dimension_numbers<[1], [0], [0], [1], [0, 0, 1, 1], [], []>} : vector<2x32xf32>, vector<32x128xf32>, vector<2x128xf32> -> vector<2x128xf32>
    %423 = vector.broadcast %186 : vector<1x128xf32> to vector<2x128xf32>
    %424 = arith.addf %422, %423 : vector<2x128xf32>
    %425 = arith.negf %424 : vector<2x128xf32>
    %426 = math.exp %425 : vector<2x128xf32>
    %cst_76 = arith.constant 1.000000e+00 : f32
    %427 = vector.broadcast %cst_76 : f32 to vector<2x128xf32>
    %428 = arith.addf %427, %426 : vector<2x128xf32>
    %429 = arith.divf %427, %428 : vector<2x128xf32>
    %430 = math.tanh %424 : vector<2x128xf32>
    %431 = vector.extract_strided_slice %429 {offsets = [0, 0], sizes = [2, 32], strides = [1, 1]} : vector<2x128xf32> to vector<2x32xf32>
    %432 = vector.extract_strided_slice %429 {offsets = [0, 32], sizes = [2, 32], strides = [1, 1]} : vector<2x128xf32> to vector<2x32xf32>
    %433 = vector.extract_strided_slice %430 {offsets = [0, 64], sizes = [2, 32], strides = [1, 1]} : vector<2x128xf32> to vector<2x32xf32>
    %434 = vector.extract_strided_slice %429 {offsets = [0, 96], sizes = [2, 32], strides = [1, 1]} : vector<2x128xf32> to vector<2x32xf32>
    %435 = arith.mulf %432, %416 : vector<2x32xf32>
    %436 = arith.mulf %431, %433 : vector<2x32xf32>
    %437 = arith.addf %435, %436 : vector<2x32xf32>
    %438 = math.tanh %437 : vector<2x32xf32>
    %439 = arith.mulf %434, %438 : vector<2x32xf32>
    %cst_77 = arith.constant dense<0.000000e+00> : vector<2x1xf32>
    %440 = tpu.matmul %439, %7, %cst_77 {dimension_numbers = #tpu.dot_dimension_numbers<[1], [0], [0], [1], [0, 0, 1, 1], [], []>} : vector<2x32xf32>, vector<32x1xf32>, vector<2x1xf32> -> vector<2x1xf32>
    %441 = vector.broadcast %8 : vector<1x1xf32> to vector<2x1xf32>
    %442 = arith.addf %440, %441 : vector<2x1xf32>
    %443 = tpu.concatenate %211, %232, %253, %274, %295, %316, %337, %358, %379, %400, %421, %442 in 1 : vector<2x1xf32>, vector<2x1xf32>, vector<2x1xf32>, vector<2x1xf32>, vector<2x1xf32>, vector<2x1xf32>, vector<2x1xf32>, vector<2x1xf32>, vector<2x1xf32>, vector<2x1xf32>, vector<2x1xf32>, vector<2x1xf32> -> vector<2x12xf32>
    %c0_78 = arith.constant 0 : index
    %c0_79 = arith.constant 0 : index
    %444 = vector.load %arg9[%c0_78, %c0_79] : memref<2x12xf32, #tpu.memory_space<vmem>>, vector<2x12xf32>
    tpu.vector_store %arg9[%c0_78, %c0_79], %443 {strides = array<i32>} : memref<2x12xf32, #tpu.memory_space<vmem>>, vector<2x12xf32>,
    return
  }
}

</mosaic_0001>

<llo_original>
// kernel: model_forward.1
$region0: #{model_forward.1}
  #allocation0 [shape = 'u32[]', space=smem, size = 0x4, offset = 0x4, fixed_abs, tag = 'smem constant byte address 0x4 - core index']
  #allocation1 [shape = 'u32[72,128]{1,0:T(1,128)}', space=vmem, size = 0x9000, scoped, tag = 'internal scratch']
  #allocation2 [shape = 'f32[1,1]{1,0:T(1,128)S(1)}', space=vmem, size = 0x200, scoped, tag = 'scoped memory for model_forward.1']
  %s0 = inlined_call_operand.vmem [shape: f32[2,32], index: 0, kind: input, shape index: {}]
  %s1 = inlined_call_operand.vmem [shape: f32[4,128], index: 1, kind: input, shape index: {}]
  %s2 = inlined_call_operand.vmem [shape: f32[32,128], index: 2, kind: input, shape index: {}]
  %s3 = inlined_call_operand.vmem [shape: f32[1,128], index: 3, kind: input, shape index: {}]
  %s4 = inlined_call_operand.vmem [shape: f32[1,128], index: 4, kind: input, shape index: {}]
  %s5 = inlined_call_operand.vmem [shape: f32[32,128], index: 5, kind: input, shape index: {}]
  %s6 = inlined_call_operand.vmem [shape: f32[1,128], index: 6, kind: input, shape index: {}]
  %s7 = inlined_call_operand.vmem [shape: f32[32,1], index: 7, kind: input, shape index: {}]
  %s8 = inlined_call_operand.<no memory space> [shape: f32[1,1], index: 8, kind: input, shape index: {}]
  %s9 = inlined_call_operand.hbm [shape: f32[2,12], index: 9, kind: output, shape index: {}]
  %s10 = sld [smem:[#allocation0]]
  $region46: #{model_forward.1} parent=0
    _
  %s12 = ssub.s32 1, %s10
  %s13 = scalar_select 0, %s12, %s10
  %v14 = vstv %s8
  %15 = vst [vmem:[#allocation2] sm:$0x1] %v14
  $region1: #{model_forward.1} parent=0
    #allocation3 [shape = 'u8[1024]{0}', space=vmem, size = 0x400, scoped, tag = 'output window, operand 0, single buffered']
    #allocation4 [shape = 's32[1]{0}', space=sflag, size = 0x4, scoped, tag = 'scoped memory for model_forward.1']
    %16 = vsyncpa [#allocation4], 0
    // Predicated region
    $region2: #{model_forward.1} parent=1 // pred_check
      _
    $region3: #{model_forward.1} parent=1 // pred_check_branch
      %18 = sbr.rel (0) target = $region5
    $region4: #{model_forward.1} parent=1 // pred_region
      _
    $region5: #{model_forward.1} parent=1 // pred_fallthru
      _
    // Predicated region
    $region6: #{model_forward.1} parent=1 // pred_check
      _
    $region7: #{model_forward.1} parent=1 // pred_check_branch
      %20 = sbr.rel (0) target = $region9
    $region8: #{model_forward.1} parent=1 // pred_region
      _
    $region9: #{model_forward.1} parent=1 // pred_fallthru
      _
    // Predicated region
    $region10: #{model_forward.1} parent=1 // pred_check
      _
    $region11: #{model_forward.1} parent=1 // pred_check_branch
      %22 = sbr.rel (0) target = $region13
    $region12: #{model_forward.1} parent=1 // pred_region
      _
    $region13: #{model_forward.1} parent=1 // pred_fallthru
      _
    // Predicated region
    $region14: #{model_forward.1} parent=1 // pred_check
      _
    $region15: #{model_forward.1} parent=1 // pred_check_branch
      %24 = sbr.rel (0) target = $region17
    $region16: #{model_forward.1} parent=1 // pred_region
      _
    $region17: #{model_forward.1} parent=1 // pred_fallthru
      _
    // Predicated region
    $region18: #{model_forward.1} parent=1 // pred_check
      _
    $region19: #{model_forward.1} parent=1 // pred_check_branch
      %26 = sbr.rel (0) target = $region21
    $region20: #{model_forward.1} parent=1 // pred_region
      _
    $region21: #{model_forward.1} parent=1 // pred_fallthru
      _
    // Predicated region
    $region22: #{model_forward.1} parent=1 // pred_check
      _
    $region23: #{model_forward.1} parent=1 // pred_check_branch
      %28 = sbr.rel (0) target = $region25
    $region24: #{model_forward.1} parent=1 // pred_region
      _
    $region25: #{model_forward.1} parent=1 // pred_fallthru
      _
    // Predicated region
    $region26: #{model_forward.1} parent=1 // pred_check
      _
    $region27: #{model_forward.1} parent=1 // pred_check_branch
      %30 = sbr.rel (0) target = $region29
    $region28: #{model_forward.1} parent=1 // pred_region
      _
    $region29: #{model_forward.1} parent=1 // pred_fallthru
      _
    // Predicated region
    $region30: #{model_forward.1} parent=1 // pred_check
      _
    $region31: #{model_forward.1} parent=1 // pred_check_branch
      %32 = sbr.rel (0) target = $region33
    $region32: #{model_forward.1} parent=1 // pred_region
      _
    $region33: #{model_forward.1} parent=1 // pred_fallthru
      _
    // Predicated region
    $region34: #{model_forward.1} parent=1 // pred_check
      _
    $region35: #{model_forward.1} parent=1 // pred_check_branch
      %34 = sbr.rel (0) target = $region37
    $region36: #{model_forward.1} parent=1 // pred_region
      _
    $region37: #{model_forward.1} parent=1 // pred_fallthru
      _
    %v35 = vld [vmem:[%s0] sm:$0x3]
    %v36 = vld [vmem:[%s1] sm:$0xf]
    %v37 = vld [vmem:[%s2] sm:$0xff]
    %v38 = vld [vmem:[%s2 + $0x8] sm:$0xff]
    %v39 = vld [vmem:[%s2 + $0x10] sm:$0xff]
    %v40 = vld [vmem:[%s2 + $0x18] sm:$0xff]
    %v41 = vld [vmem:[%s3] sm:$0x1]
    %v42 = vld [vmem:[%s4] sm:$0x1]
    %v43 = vld [vmem:[%s5] sm:$0xff]
    %v44 = vld [vmem:[%s5 + $0x8] sm:$0xff]
    %v45 = vld [vmem:[%s5 + $0x10] sm:$0xff]
    %v46 = vld [vmem:[%s5 + $0x18] sm:$0xff]
    %v47 = vld [vmem:[%s6] sm:$0x1]
    %v48 = vld [vmem:[%s7] sm:$0xff]
    %v49 = vld [vmem:[%s7 + $0x8] sm:$0xff]
    %v50 = vld [vmem:[%s7 + $0x10] sm:$0xff]
    %v51 = vld [vmem:[%s7 + $0x18] sm:$0xff]
    %v52 = vld [vmem:[#allocation2] sm:$0x1]
    %vm53 = vcmask 261120
    %v55 = vsel %vm53, 0.0, 0
    %57 = vmatpush.msra.mxu0 0.0
    %58 = vmatpush.msra.mxu0 0.0
    %59 = vmatpush.msra.mxu0 0.0
    %60 = vmatpush.msra.mxu0 0.0
    %61 = vmatpush.msra.mxu0 0.0
    %62 = vmatpush.msra.mxu0 0.0
    %63 = vmatpush.msra.mxu0 0.0
    %64 = vmatpush.msra.mxu0 0.0
    %65 = vmatpush.msra.mxu0 0.0
    %66 = vmatpush.msra.mxu0 0.0
    %67 = vmatpush.msra.mxu0 0.0
    %68 = vmatpush.msra.mxu0 0.0
    %69 = vmatpush.msra.mxu0 %v40
    %70 = vmatpush.msra.mxu0 %v39
    %71 = vmatpush.msra.mxu0 %v38
    %72 = vmatpush.msra.mxu0 %v37
    %73 = vmatmul.f32.gmra.mxu0 %v55
    %v74 = vpop.f32.mrf.mxu0
    %v75 = vadd.f32 0.0, %v74
    %76 = vdwg.mxu0
    %vm77 = vcmask 31744
    %v79 = vsel %vm77, %v35, 0
    %vm81 = vcmask 1043456
    %v83 = vsel %vm81, %v36, 0
    %85 = vmatpush.msra.mxu0 0.0
    %86 = vmatpush.msra.mxu0 0.0
    %87 = vmatpush.msra.mxu0 0.0
    %88 = vmatpush.msra.mxu0 0.0
    %89 = vmatpush.msra.mxu0 0.0
    %90 = vmatpush.msra.mxu0 0.0
    %91 = vmatpush.msra.mxu0 0.0
    %92 = vmatpush.msra.mxu0 0.0
    %93 = vmatpush.msra.mxu0 0.0
    %94 = vmatpush.msra.mxu0 0.0
    %95 = vmatpush.msra.mxu0 0.0
    %96 = vmatpush.msra.mxu0 0.0
    %97 = vmatpush.msra.mxu0 0.0
    %98 = vmatpush.msra.mxu0 0.0
    %99 = vmatpush.msra.mxu0 0.0
    %100 = vmatpush.msra.mxu0 %v83
    %101 = vmatmul.f32.gmra.mxu0 %v79
    %v102 = vpop.f32.mrf.mxu0
    %v103 = vadd.f32 %v75, %v102
    %104 = vdwg.mxu0
    %v106 = vperm.slane %v41, 0
    %v108 = vadd.f32 %v103, %v106
    %v109 = vxor.u32 %v108, 2147483648
    %v110 = vmul.f32 %v109, 1.442695
    %v111 = vpow.pop %v110
    %v112 = vadd.f32 %v111, 1.0
    %v113 = vrcp.pop %v112
    %v114 = vmul.f32 %v112, %v113
    %v115 = vsub.f32 1.0, %v114
    %v116 = vmul.f32 %v113, %v115
    %v117 = vadd.f32 %v113, %v116
    %vm118 = vweird.f32 %v112
    %vm119 = vweird.f32 %v113
    %vm120 = vmor %vm118, %vm119
    %v121 = vsel %vm120, %v113, %v117
    %v122 = vand.u32 2147483647, %v112
    %vm123 = vcmp.eq.f32.partialorder %v122, 8.507059e+37
    %v124 = vand.u32 %v112, 2147483648
    %v125 = vor.u32 1.1754944e-38, %v124
    %v126 = vsel %vm123, %v125, %v121
    %v127 = vmul.f32 1.0, %v126
    %v128 = vtanh.pop %v108
    %v129 = vmul.f32 %v127, 0.0
    %131 = vrot.lane.b32.xlu0 %v128, 64
    %v132 = vpop.permute.xlu0 %131
    %v134 = vmul.f32 %v127, %v132
    %136 = vrot.lane.b32.xlu0 %v134, 32
    %v137 = vpop.permute.xlu0 %136
    %v139 = vadd.f32 %v129, %v137
    %v140 = vtanh.pop %v139
    %142 = vrot.lane.b32.xlu0 %v140, 64
    %v143 = vpop.permute.xlu0 %142
    %v145 = vmul.f32 %v127, %v143
    %147 = vrot.lane.b32.xlu0 %v145, 32
    %v148 = vpop.permute.xlu0 %147
    %v149 = vsel %vm53, %v148, 0
    %151 = vmatpush.msra.mxu0 0.0
    %152 = vmatpush.msra.mxu0 0.0
    %153 = vmatpush.msra.mxu0 0.0
    %154 = vmatpush.msra.mxu0 0.0
    %155 = vmatpush.msra.mxu0 0.0
    %156 = vmatpush.msra.mxu0 0.0
    %157 = vmatpush.msra.mxu0 0.0
    %158 = vmatpush.msra.mxu0 0.0
    %159 = vmatpush.msra.mxu0 0.0
    %160 = vmatpush.msra.mxu0 0.0
    %161 = vmatpush.msra.mxu0 0.0
    %162 = vmatpush.msra.mxu0 0.0
    %163 = vmatpush.msra.mxu0 %v40
    %164 = vmatpush.msra.mxu0 %v39
    %165 = vmatpush.msra.mxu0 %v38
    %166 = vmatpush.msra.mxu0 %v37
    %167 = vmatmul.f32.gmra.mxu0 %v149
    %v168 = vpop.f32.mrf.mxu0
    %v169 = vadd.f32 0.0, %v168
    %170 = vdwg.mxu0
    %171 = vrot.lane.b32.xlu0 %v35, 124
    %v172 = vpop.permute.xlu0 %171
    %v173 = vsel %vm77, %v172, 0
    %175 = vmatpush.msra.mxu0 0.0
    %176 = vmatpush.msra.mxu0 0.0
    %177 = vmatpush.msra.mxu0 0.0
    %178 = vmatpush.msra.mxu0 0.0
    %179 = vmatpush.msra.mxu0 0.0
    %180 = vmatpush.msra.mxu0 0.0
    %181 = vmatpush.msra.mxu0 0.0
    %182 = vmatpush.msra.mxu0 0.0
    %183 = vmatpush.msra.mxu0 0.0
    %184 = vmatpush.msra.mxu0 0.0
    %185 = vmatpush.msra.mxu0 0.0
    %186 = vmatpush.msra.mxu0 0.0
    %187 = vmatpush.msra.mxu0 0.0
    %188 = vmatpush.msra.mxu0 0.0
    %189 = vmatpush.msra.mxu0 0.0
    %190 = vmatpush.msra.mxu0 %v83
    %191 = vmatmul.f32.gmra.mxu0 %v173
    %v192 = vpop.f32.mrf.mxu0
    %v193 = vadd.f32 %v169, %v192
    %194 = vdwg.mxu0
    %v195 = vadd.f32 %v193, %v106
    %v196 = vxor.u32 %v195, 2147483648
    %v197 = vmul.f32 %v196, 1.442695
    %v198 = vpow.pop %v197
    %v199 = vadd.f32 %v198, 1.0
    %v200 = vrcp.pop %v199
    %v201 = vmul.f32 %v199, %v200
    %v202 = vsub.f32 1.0, %v201
    %v203 = vmul.f32 %v200, %v202
    %v204 = vadd.f32 %v200, %v203
    %vm205 = vweird.f32 %v199
    %vm206 = vweird.f32 %v200
    %vm207 = vmor %vm205, %vm206
    %v208 = vsel %vm207, %v200, %v204
    %v209 = vand.u32 2147483647, %v199
    %vm210 = vcmp.eq.f32.partialorder %v209, 8.507059e+37
    %v211 = vand.u32 %v199, 2147483648
    %v212 = vor.u32 1.1754944e-38, %v211
    %v213 = vsel %vm210, %v212, %v208
    %v214 = vmul.f32 1.0, %v213
    %v215 = vtanh.pop %v195
    %v216 = vmul.f32 %v214, %v139
    %218 = vrot.lane.b32.xlu0 %v215, 64
    %v219 = vpop.permute.xlu0 %218
    %v221 = vmul.f32 %v214, %v219
    %223 = vrot.lane.b32.xlu0 %v221, 32
    %v224 = vpop.permute.xlu0 %223
    %v226 = vadd.f32 %v216, %v224
    %v227 = vtanh.pop %v226
    %229 = vrot.lane.b32.xlu0 %v227, 64
    %v230 = vpop.permute.xlu0 %229
    %v232 = vmul.f32 %v214, %v230
    %234 = vrot.lane.b32.xlu0 %v232, 32
    %v235 = vpop.permute.xlu0 %234
    %v236 = vsel %vm53, %v235, 0
    %238 = vmatpush.msra.mxu0 0.0
    %239 = vmatpush.msra.mxu0 0.0
    %240 = vmatpush.msra.mxu0 0.0
    %241 = vmatpush.msra.mxu0 0.0
    %242 = vmatpush.msra.mxu0 0.0
    %243 = vmatpush.msra.mxu0 0.0
    %244 = vmatpush.msra.mxu0 0.0
    %245 = vmatpush.msra.mxu0 0.0
    %246 = vmatpush.msra.mxu0 0.0
    %247 = vmatpush.msra.mxu0 0.0
    %248 = vmatpush.msra.mxu0 0.0
    %249 = vmatpush.msra.mxu0 0.0
    %250 = vmatpush.msra.mxu0 %v40
    %251 = vmatpush.msra.mxu0 %v39
    %252 = vmatpush.msra.mxu0 %v38
    %253 = vmatpush.msra.mxu0 %v37
    %254 = vmatmul.f32.gmra.mxu0 %v236
    %v255 = vpop.f32.mrf.mxu0
    %v256 = vadd.f32 0.0, %v255
    %257 = vdwg.mxu0
    %258 = vrot.lane.b32.xlu0 %v35, 120
    %v259 = vpop.permute.xlu0 %258
    %v260 = vsel %vm77, %v259, 0
    %262 = vmatpush.msra.mxu0 0.0
    %263 = vmatpush.msra.mxu0 0.0
    %264 = vmatpush.msra.mxu0 0.0
    %265 = vmatpush.msra.mxu0 0.0
    %266 = vmatpush.msra.mxu0 0.0
    %267 = vmatpush.msra.mxu0 0.0
    %268 = vmatpush.msra.mxu0 0.0
    %269 = vmatpush.msra.mxu0 0.0
    %270 = vmatpush.msra.mxu0 0.0
    %271 = vmatpush.msra.mxu0 0.0
    %272 = vmatpush.msra.mxu0 0.0
    %273 = vmatpush.msra.mxu0 0.0
    %274 = vmatpush.msra.mxu0 0.0
    %275 = vmatpush.msra.mxu0 0.0
    %276 = vmatpush.msra.mxu0 0.0
    %277 = vmatpush.msra.mxu0 %v83
    %278 = vmatmul.f32.gmra.mxu0 %v260
    %v279 = vpop.f32.mrf.mxu0
    %v280 = vadd.f32 %v256, %v279
    %281 = vdwg.mxu0
    %v282 = vadd.f32 %v280, %v106
    %v283 = vxor.u32 %v282, 2147483648
    %v284 = vmul.f32 %v283, 1.442695
    %v285 = vpow.pop %v284
    %v286 = vadd.f32 %v285, 1.0
    %v287 = vrcp.pop %v286
    %v288 = vmul.f32 %v286, %v287
    %v289 = vsub.f32 1.0, %v288
    %v290 = vmul.f32 %v287, %v289
    %v291 = vadd.f32 %v287, %v290
    %vm292 = vweird.f32 %v286
    %vm293 = vweird.f32 %v287
    %vm294 = vmor %vm292, %vm293
    %v295 = vsel %vm294, %v287, %v291
    %v296 = vand.u32 2147483647, %v286
    %vm297 = vcmp.eq.f32.partialorder %v296, 8.507059e+37
    %v298 = vand.u32 %v286, 2147483648
    %v299 = vor.u32 1.1754944e-38, %v298
    %v300 = vsel %vm297, %v299, %v295
    %v301 = vmul.f32 1.0, %v300
    %v302 = vtanh.pop %v282
    %v303 = vmul.f32 %v301, %v226
    %305 = vrot.lane.b32.xlu0 %v302, 64
    %v306 = vpop.permute.xlu0 %305
    %v308 = vmul.f32 %v301, %v306
    %310 = vrot.lane.b32.xlu0 %v308, 32
    %v311 = vpop.permute.xlu0 %310
    %v313 = vadd.f32 %v303, %v311
    %v314 = vtanh.pop %v313
    %316 = vrot.lane.b32.xlu0 %v314, 64
    %v317 = vpop.permute.xlu0 %316
    %v319 = vmul.f32 %v301, %v317
    %321 = vrot.lane.b32.xlu0 %v319, 32
    %v322 = vpop.permute.xlu0 %321
    %v323 = vsel %vm53, %v322, 0
    %325 = vmatpush.msra.mxu0 0.0
    %326 = vmatpush.msra.mxu0 0.0
    %327 = vmatpush.msra.mxu0 0.0
    %328 = vmatpush.msra.mxu0 0.0
    %329 = vmatpush.msra.mxu0 0.0
    %330 = vmatpush.msra.mxu0 0.0
    %331 = vmatpush.msra.mxu0 0.0
    %332 = vmatpush.msra.mxu0 0.0
    %333 = vmatpush.msra.mxu0 0.0
    %334 = vmatpush.msra.mxu0 0.0
    %335 = vmatpush.msra.mxu0 0.0
    %336 = vmatpush.msra.mxu0 0.0
    %337 = vmatpush.msra.mxu0 %v40
    %338 = vmatpush.msra.mxu0 %v39
    %339 = vmatpush.msra.mxu0 %v38
    %340 = vmatpush.msra.mxu0 %v37
    %341 = vmatmul.f32.gmra.mxu0 %v323
    %v342 = vpop.f32.mrf.mxu0
    %v343 = vadd.f32 0.0, %v342
    %344 = vdwg.mxu0
    %345 = vrot.lane.b32.xlu0 %v35, 116
    %v346 = vpop.permute.xlu0 %345
    %v347 = vsel %vm77, %v346, 0
    %349 = vmatpush.msra.mxu0 0.0
    %350 = vmatpush.msra.mxu0 0.0
    %351 = vmatpush.msra.mxu0 0.0
    %352 = vmatpush.msra.mxu0 0.0
    %353 = vmatpush.msra.mxu0 0.0
    %354 = vmatpush.msra.mxu0 0.0
    %355 = vmatpush.msra.mxu0 0.0
    %356 = vmatpush.msra.mxu0 0.0
    %357 = vmatpush.msra.mxu0 0.0
    %358 = vmatpush.msra.mxu0 0.0
    %359 = vmatpush.msra.mxu0 0.0
    %360 = vmatpush.msra.mxu0 0.0
    %361 = vmatpush.msra.mxu0 0.0
    %362 = vmatpush.msra.mxu0 0.0
    %363 = vmatpush.msra.mxu0 0.0
    %364 = vmatpush.msra.mxu0 %v83
    %365 = vmatmul.f32.gmra.mxu0 %v347
    %v366 = vpop.f32.mrf.mxu0
    %v367 = vadd.f32 %v343, %v366
    %368 = vdwg.mxu0
    %v369 = vadd.f32 %v367, %v106
    %v370 = vxor.u32 %v369, 2147483648
    %v371 = vmul.f32 %v370, 1.442695
    %v372 = vpow.pop %v371
    %v373 = vadd.f32 %v372, 1.0
    %v374 = vrcp.pop %v373
    %v375 = vmul.f32 %v373, %v374
    %v376 = vsub.f32 1.0, %v375
    %v377 = vmul.f32 %v374, %v376
    %v378 = vadd.f32 %v374, %v377
    %vm379 = vweird.f32 %v373
    %vm380 = vweird.f32 %v374
    %vm381 = vmor %vm379, %vm380
    %v382 = vsel %vm381, %v374, %v378
    %v383 = vand.u32 2147483647, %v373
    %vm384 = vcmp.eq.f32.partialorder %v383, 8.507059e+37
    %v385 = vand.u32 %v373, 2147483648
    %v386 = vor.u32 1.1754944e-38, %v385
    %v387 = vsel %vm384, %v386, %v382
    %v388 = vmul.f32 1.0, %v387
    %v389 = vtanh.pop %v369
    %v390 = vmul.f32 %v388, %v313
    %392 = vrot.lane.b32.xlu0 %v389, 64
    %v393 = vpop.permute.xlu0 %392
    %v395 = vmul.f32 %v388, %v393
    %397 = vrot.lane.b32.xlu0 %v395, 32
    %v398 = vpop.permute.xlu0 %397
    %v400 = vadd.f32 %v390, %v398
    %v401 = vtanh.pop %v400
    %403 = vrot.lane.b32.xlu0 %v401, 64
    %v404 = vpop.permute.xlu0 %403
    %v406 = vmul.f32 %v388, %v404
    %408 = vrot.lane.b32.xlu0 %v406, 32
    %v409 = vpop.permute.xlu0 %408
    %v410 = vsel %vm53, %v409, 0
    %412 = vmatpush.msra.mxu0 0.0
    %413 = vmatpush.msra.mxu0 0.0
    %414 = vmatpush.msra.mxu0 0.0
    %415 = vmatpush.msra.mxu0 0.0
    %416 = vmatpush.msra.mxu0 0.0
    %417 = vmatpush.msra.mxu0 0.0
    %418 = vmatpush.msra.mxu0 0.0
    %419 = vmatpush.msra.mxu0 0.0
    %420 = vmatpush.msra.mxu0 0.0
    %421 = vmatpush.msra.mxu0 0.0
    %422 = vmatpush.msra.mxu0 0.0
    %423 = vmatpush.msra.mxu0 0.0
    %424 = vmatpush.msra.mxu0 %v40
    %425 = vmatpush.msra.mxu0 %v39
    %426 = vmatpush.msra.mxu0 %v38
    %427 = vmatpush.msra.mxu0 %v37
    %428 = vmatmul.f32.gmra.mxu0 %v410
    %v429 = vpop.f32.mrf.mxu0
    %v430 = vadd.f32 0.0, %v429
    %431 = vdwg.mxu0
    %432 = vrot.lane.b32.xlu0 %v35, 112
    %v433 = vpop.permute.xlu0 %432
    %v434 = vsel %vm77, %v433, 0
    %436 = vmatpush.msra.mxu0 0.0
    %437 = vmatpush.msra.mxu0 0.0
    %438 = vmatpush.msra.mxu0 0.0
    %439 = vmatpush.msra.mxu0 0.0
    %440 = vmatpush.msra.mxu0 0.0
    %441 = vmatpush.msra.mxu0 0.0
    %442 = vmatpush.msra.mxu0 0.0
    %443 = vmatpush.msra.mxu0 0.0
    %444 = vmatpush.msra.mxu0 0.0
    %445 = vmatpush.msra.mxu0 0.0
    %446 = vmatpush.msra.mxu0 0.0
    %447 = vmatpush.msra.mxu0 0.0
    %448 = vmatpush.msra.mxu0 0.0
    %449 = vmatpush.msra.mxu0 0.0
    %450 = vmatpush.msra.mxu0 0.0
    %451 = vmatpush.msra.mxu0 %v83
    %452 = vmatmul.f32.gmra.mxu0 %v434
    %v453 = vpop.f32.mrf.mxu0
    %v454 = vadd.f32 %v430, %v453
    %455 = vdwg.mxu0
    %v456 = vadd.f32 %v454, %v106
    %v457 = vxor.u32 %v456, 2147483648
    %v458 = vmul.f32 %v457, 1.442695
    %v459 = vpow.pop %v458
    %v460 = vadd.f32 %v459, 1.0
    %v461 = vrcp.pop %v460
    %v462 = vmul.f32 %v460, %v461
    %v463 = vsub.f32 1.0, %v462
    %v464 = vmul.f32 %v461, %v463
    %v465 = vadd.f32 %v461, %v464
    %vm466 = vweird.f32 %v460
    %vm467 = vweird.f32 %v461
    %vm468 = vmor %vm466, %vm467
    %v469 = vsel %vm468, %v461, %v465
    %v470 = vand.u32 2147483647, %v460
    %vm471 = vcmp.eq.f32.partialorder %v470, 8.507059e+37
    %v472 = vand.u32 %v460, 2147483648
    %v473 = vor.u32 1.1754944e-38, %v472
    %v474 = vsel %vm471, %v473, %v469
    %v475 = vmul.f32 1.0, %v474
    %v476 = vtanh.pop %v456
    %v477 = vmul.f32 %v475, %v400
    %479 = vrot.lane.b32.xlu0 %v476, 64
    %v480 = vpop.permute.xlu0 %479
    %v482 = vmul.f32 %v475, %v480
    %484 = vrot.lane.b32.xlu0 %v482, 32
    %v485 = vpop.permute.xlu0 %484
    %v487 = vadd.f32 %v477, %v485
    %v488 = vtanh.pop %v487
    %490 = vrot.lane.b32.xlu0 %v488, 64
    %v491 = vpop.permute.xlu0 %490
    %v493 = vmul.f32 %v475, %v491
    %495 = vrot.lane.b32.xlu0 %v493, 32
    %v496 = vpop.permute.xlu0 %495
    %v497 = vsel %vm53, %v496, 0
    %499 = vmatpush.msra.mxu0 0.0
    %500 = vmatpush.msra.mxu0 0.0
    %501 = vmatpush.msra.mxu0 0.0
    %502 = vmatpush.msra.mxu0 0.0
    %503 = vmatpush.msra.mxu0 0.0
    %504 = vmatpush.msra.mxu0 0.0
    %505 = vmatpush.msra.mxu0 0.0
    %506 = vmatpush.msra.mxu0 0.0
    %507 = vmatpush.msra.mxu0 0.0
    %508 = vmatpush.msra.mxu0 0.0
    %509 = vmatpush.msra.mxu0 0.0
    %510 = vmatpush.msra.mxu0 0.0
    %511 = vmatpush.msra.mxu0 %v40
    %512 = vmatpush.msra.mxu0 %v39
    %513 = vmatpush.msra.mxu0 %v38
    %514 = vmatpush.msra.mxu0 %v37
    %515 = vmatmul.f32.gmra.mxu0 %v497
    %v516 = vpop.f32.mrf.mxu0
    %v517 = vadd.f32 0.0, %v516
    %518 = vdwg.mxu0
    %519 = vrot.lane.b32.xlu0 %v35, 108
    %v520 = vpop.permute.xlu0 %519
    %v521 = vsel %vm77, %v520, 0
    %523 = vmatpush.msra.mxu0 0.0
    %524 = vmatpush.msra.mxu0 0.0
    %525 = vmatpush.msra.mxu0 0.0
    %526 = vmatpush.msra.mxu0 0.0
    %527 = vmatpush.msra.mxu0 0.0
    %528 = vmatpush.msra.mxu0 0.0
    %529 = vmatpush.msra.mxu0 0.0
    %530 = vmatpush.msra.mxu0 0.0
    %531 = vmatpush.msra.mxu0 0.0
    %532 = vmatpush.msra.mxu0 0.0
    %533 = vmatpush.msra.mxu0 0.0
    %534 = vmatpush.msra.mxu0 0.0
    %535 = vmatpush.msra.mxu0 0.0
    %536 = vmatpush.msra.mxu0 0.0
    %537 = vmatpush.msra.mxu0 0.0
    %538 = vmatpush.msra.mxu0 %v83
    %539 = vmatmul.f32.gmra.mxu0 %v521
    %v540 = vpop.f32.mrf.mxu0
    %v541 = vadd.f32 %v517, %v540
    %542 = vdwg.mxu0
    %v543 = vadd.f32 %v541, %v106
    %v544 = vxor.u32 %v543, 2147483648
    %v545 = vmul.f32 %v544, 1.442695
    %v546 = vpow.pop %v545
    %v547 = vadd.f32 %v546, 1.0
    %v548 = vrcp.pop %v547
    %v549 = vmul.f32 %v547, %v548
    %v550 = vsub.f32 1.0, %v549
    %v551 = vmul.f32 %v548, %v550
    %v552 = vadd.f32 %v548, %v551
    %vm553 = vweird.f32 %v547
    %vm554 = vweird.f32 %v548
    %vm555 = vmor %vm553, %vm554
    %v556 = vsel %vm555, %v548, %v552
    %v557 = vand.u32 2147483647, %v547
    %vm558 = vcmp.eq.f32.partialorder %v557, 8.507059e+37
    %v559 = vand.u32 %v547, 2147483648
    %v560 = vor.u32 1.1754944e-38, %v559
    %v561 = vsel %vm558, %v560, %v556
    %v562 = vmul.f32 1.0, %v561
    %v563 = vtanh.pop %v543
    %v564 = vmul.f32 %v562, %v487
    %566 = vrot.lane.b32.xlu0 %v563, 64
    %v567 = vpop.permute.xlu0 %566
    %v569 = vmul.f32 %v562, %v567
    %571 = vrot.lane.b32.xlu0 %v569, 32
    %v572 = vpop.permute.xlu0 %571
    %v574 = vadd.f32 %v564, %v572
    %v575 = vtanh.pop %v574
    %577 = vrot.lane.b32.xlu0 %v575, 64
    %v578 = vpop.permute.xlu0 %577
    %v580 = vmul.f32 %v562, %v578
    %582 = vrot.lane.b32.xlu0 %v580, 32
    %v583 = vpop.permute.xlu0 %582
    %v584 = vsel %vm53, %v583, 0
    %586 = vmatpush.msra.mxu0 0.0
    %587 = vmatpush.msra.mxu0 0.0
    %588 = vmatpush.msra.mxu0 0.0
    %589 = vmatpush.msra.mxu0 0.0
    %590 = vmatpush.msra.mxu0 0.0
    %591 = vmatpush.msra.mxu0 0.0
    %592 = vmatpush.msra.mxu0 0.0
    %593 = vmatpush.msra.mxu0 0.0
    %594 = vmatpush.msra.mxu0 0.0
    %595 = vmatpush.msra.mxu0 0.0
    %596 = vmatpush.msra.mxu0 0.0
    %597 = vmatpush.msra.mxu0 0.0
    %598 = vmatpush.msra.mxu0 %v40
    %599 = vmatpush.msra.mxu0 %v39
    %600 = vmatpush.msra.mxu0 %v38
    %601 = vmatpush.msra.mxu0 %v37
    %602 = vmatmul.f32.gmra.mxu0 %v584
    %v603 = vpop.f32.mrf.mxu0
    %v604 = vadd.f32 0.0, %v603
    %605 = vdwg.mxu0
    %606 = vrot.lane.b32.xlu0 %v35, 104
    %v607 = vpop.permute.xlu0 %606
    %v608 = vsel %vm77, %v607, 0
    %610 = vmatpush.msra.mxu0 0.0
    %611 = vmatpush.msra.mxu0 0.0
    %612 = vmatpush.msra.mxu0 0.0
    %613 = vmatpush.msra.mxu0 0.0
    %614 = vmatpush.msra.mxu0 0.0
    %615 = vmatpush.msra.mxu0 0.0
    %616 = vmatpush.msra.mxu0 0.0
    %617 = vmatpush.msra.mxu0 0.0
    %618 = vmatpush.msra.mxu0 0.0
    %619 = vmatpush.msra.mxu0 0.0
    %620 = vmatpush.msra.mxu0 0.0
    %621 = vmatpush.msra.mxu0 0.0
    %622 = vmatpush.msra.mxu0 0.0
    %623 = vmatpush.msra.mxu0 0.0
    %624 = vmatpush.msra.mxu0 0.0
    %625 = vmatpush.msra.mxu0 %v83
    %626 = vmatmul.f32.gmra.mxu0 %v608
    %v627 = vpop.f32.mrf.mxu0
    %v628 = vadd.f32 %v604, %v627
    %629 = vdwg.mxu0
    %v630 = vadd.f32 %v628, %v106
    %v631 = vxor.u32 %v630, 2147483648
    %v632 = vmul.f32 %v631, 1.442695
    %v633 = vpow.pop %v632
    %v634 = vadd.f32 %v633, 1.0
    %v635 = vrcp.pop %v634
    %v636 = vmul.f32 %v634, %v635
    %v637 = vsub.f32 1.0, %v636
    %v638 = vmul.f32 %v635, %v637
    %v639 = vadd.f32 %v635, %v638
    %vm640 = vweird.f32 %v634
    %vm641 = vweird.f32 %v635
    %vm642 = vmor %vm640, %vm641
    %v643 = vsel %vm642, %v635, %v639
    %v644 = vand.u32 2147483647, %v634
    %vm645 = vcmp.eq.f32.partialorder %v644, 8.507059e+37
    %v646 = vand.u32 %v634, 2147483648
    %v647 = vor.u32 1.1754944e-38, %v646
    %v648 = vsel %vm645, %v647, %v643
    %v649 = vmul.f32 1.0, %v648
    %v650 = vtanh.pop %v630
    %v651 = vmul.f32 %v649, %v574
    %653 = vrot.lane.b32.xlu0 %v650, 64
    %v654 = vpop.permute.xlu0 %653
    %v656 = vmul.f32 %v649, %v654
    %658 = vrot.lane.b32.xlu0 %v656, 32
    %v659 = vpop.permute.xlu0 %658
    %v661 = vadd.f32 %v651, %v659
    %v662 = vtanh.pop %v661
    %664 = vrot.lane.b32.xlu0 %v662, 64
    %v665 = vpop.permute.xlu0 %664
    %v667 = vmul.f32 %v649, %v665
    %669 = vrot.lane.b32.xlu0 %v667, 32
    %v670 = vpop.permute.xlu0 %669
    %v671 = vsel %vm53, %v670, 0
    %673 = vmatpush.msra.mxu0 0.0
    %674 = vmatpush.msra.mxu0 0.0
    %675 = vmatpush.msra.mxu0 0.0
    %676 = vmatpush.msra.mxu0 0.0
    %677 = vmatpush.msra.mxu0 0.0
    %678 = vmatpush.msra.mxu0 0.0
    %679 = vmatpush.msra.mxu0 0.0
    %680 = vmatpush.msra.mxu0 0.0
    %681 = vmatpush.msra.mxu0 0.0
    %682 = vmatpush.msra.mxu0 0.0
    %683 = vmatpush.msra.mxu0 0.0
    %684 = vmatpush.msra.mxu0 0.0
    %685 = vmatpush.msra.mxu0 %v40
    %686 = vmatpush.msra.mxu0 %v39
    %687 = vmatpush.msra.mxu0 %v38
    %688 = vmatpush.msra.mxu0 %v37
    %689 = vmatmul.f32.gmra.mxu0 %v671
    %v690 = vpop.f32.mrf.mxu0
    %v691 = vadd.f32 0.0, %v690
    %692 = vdwg.mxu0
    %693 = vrot.lane.b32.xlu0 %v35, 100
    %v694 = vpop.permute.xlu0 %693
    %v695 = vsel %vm77, %v694, 0
    %697 = vmatpush.msra.mxu0 0.0
    %698 = vmatpush.msra.mxu0 0.0
    %699 = vmatpush.msra.mxu0 0.0
    %700 = vmatpush.msra.mxu0 0.0
    %701 = vmatpush.msra.mxu0 0.0
    %702 = vmatpush.msra.mxu0 0.0
    %703 = vmatpush.msra.mxu0 0.0
    %704 = vmatpush.msra.mxu0 0.0
    %705 = vmatpush.msra.mxu0 0.0
    %706 = vmatpush.msra.mxu0 0.0
    %707 = vmatpush.msra.mxu0 0.0
    %708 = vmatpush.msra.mxu0 0.0
    %709 = vmatpush.msra.mxu0 0.0
    %710 = vmatpush.msra.mxu0 0.0
    %711 = vmatpush.msra.mxu0 0.0
    %712 = vmatpush.msra.mxu0 %v83
    %713 = vmatmul.f32.gmra.mxu0 %v695
    %v714 = vpop.f32.mrf.mxu0
    %v715 = vadd.f32 %v691, %v714
    %716 = vdwg.mxu0
    %v717 = vadd.f32 %v715, %v106
    %v718 = vxor.u32 %v717, 2147483648
    %v719 = vmul.f32 %v718, 1.442695
    %v720 = vpow.pop %v719
    %v721 = vadd.f32 %v720, 1.0
    %v722 = vrcp.pop %v721
    %v723 = vmul.f32 %v721, %v722
    %v724 = vsub.f32 1.0, %v723
    %v725 = vmul.f32 %v722, %v724
    %v726 = vadd.f32 %v722, %v725
    %vm727 = vweird.f32 %v721
    %vm728 = vweird.f32 %v722
    %vm729 = vmor %vm727, %vm728
    %v730 = vsel %vm729, %v722, %v726
    %v731 = vand.u32 2147483647, %v721
    %vm732 = vcmp.eq.f32.partialorder %v731, 8.507059e+37
    %v733 = vand.u32 %v721, 2147483648
    %v734 = vor.u32 1.1754944e-38, %v733
    %v735 = vsel %vm732, %v734, %v730
    %v736 = vmul.f32 1.0, %v735
    %v737 = vtanh.pop %v717
    %v738 = vmul.f32 %v736, %v661
    %740 = vrot.lane.b32.xlu0 %v737, 64
    %v741 = vpop.permute.xlu0 %740
    %v743 = vmul.f32 %v736, %v741
    %745 = vrot.lane.b32.xlu0 %v743, 32
    %v746 = vpop.permute.xlu0 %745
    %v748 = vadd.f32 %v738, %v746
    %v749 = vtanh.pop %v748
    %751 = vrot.lane.b32.xlu0 %v749, 64
    %v752 = vpop.permute.xlu0 %751
    %v754 = vmul.f32 %v736, %v752
    %756 = vset.pattern.permute.xlu0 0
    %757 = vperm.xlu0 %756, %v48
    %v758 = vpop.permute.xlu0 %757
    %761 = vset.pattern.permute.xlu0 0
    %762 = vperm.xlu0 %761, %v49
    %v763 = vpop.permute.xlu0 %762
    %766 = vset.pattern.permute.xlu0 0
    %767 = vperm.xlu0 %766, %v50
    %v768 = vpop.permute.xlu0 %767
    %771 = vset.pattern.permute.xlu0 0
    %772 = vperm.xlu0 %771, %v51
    %v773 = vpop.permute.xlu0 %772
    %v776 = vperm.slane %v42, 0
    %v778 = vmul.f32 %v758, %v776
    %v779 = vmul.f32 %v763, %v776
    %v780 = vmul.f32 %v768, %v776
    %v781 = vmul.f32 %v773, %v776
    %v782 = vadd.f32 %v43, %v778
    %v783 = vadd.f32 %v44, %v779
    %v784 = vadd.f32 %v45, %v780
    %v785 = vadd.f32 %v46, %v781
    %787 = vset.pattern.permute.xlu0 0
    %788 = vperm.xlu0 %787, %v52
    %v789 = vpop.permute.xlu0 %788
    %v791 = vperm.slane %v789, 0
    %v792 = vmul.f32 %v791, %v42
    %v793 = vadd.f32 %v47, %v792
    %794 = vset.pattern.permute.xlu0 31
    %795 = vperm.xlu0 %794, %v35
    %v796 = vpop.permute.xlu0 %795
    %v798 = vmul.f32 %v796, %v776
    %800 = vrot.lane.b32.xlu0 %v754, 32
    %v801 = vpop.permute.xlu0 %800
    %v802 = vsel %vm53, %v801, 0
    %804 = vmatpush.msra.mxu0 0.0
    %805 = vmatpush.msra.mxu0 0.0
    %806 = vmatpush.msra.mxu0 0.0
    %807 = vmatpush.msra.mxu0 0.0
    %808 = vmatpush.msra.mxu0 0.0
    %809 = vmatpush.msra.mxu0 0.0
    %810 = vmatpush.msra.mxu0 0.0
    %811 = vmatpush.msra.mxu0 0.0
    %812 = vmatpush.msra.mxu0 0.0
    %813 = vmatpush.msra.mxu0 0.0
    %814 = vmatpush.msra.mxu0 0.0
    %815 = vmatpush.msra.mxu0 0.0
    %816 = vmatpush.msra.mxu0 %v46
    %817 = vmatpush.msra.mxu0 %v45
    %818 = vmatpush.msra.mxu0 %v44
    %819 = vmatpush.msra.mxu0 %v43
    %820 = vmatmul.f32.gmra.mxu0 %v802
    %v821 = vpop.f32.mrf.mxu0
    %v822 = vadd.f32 0.0, %v821
    %823 = vdwg.mxu0
    %v824 = vadd.f32 %v798, %v822
    %v826 = vperm.slane %v47, 0
    %v828 = vadd.f32 %v824, %v826
    %v829 = vxor.u32 %v828, 2147483648
    %v830 = vmul.f32 %v829, 1.442695
    %v831 = vpow.pop %v830
    %v832 = vadd.f32 %v831, 1.0
    %v833 = vrcp.pop %v832
    %v834 = vmul.f32 %v832, %v833
    %v835 = vsub.f32 1.0, %v834
    %v836 = vmul.f32 %v833, %v835
    %v837 = vadd.f32 %v833, %v836
    %vm838 = vweird.f32 %v832
    %vm839 = vweird.f32 %v833
    %vm840 = vmor %vm838, %vm839
    %v841 = vsel %vm840, %v833, %v837
    %v842 = vand.u32 2147483647, %v832
    %vm843 = vcmp.eq.f32.partialorder %v842, 8.507059e+37
    %v844 = vand.u32 %v832, 2147483648
    %v845 = vor.u32 1.1754944e-38, %v844
    %v846 = vsel %vm843, %v845, %v841
    %v847 = vmul.f32 1.0, %v846
    %v848 = vtanh.pop %v828
    %v849 = vmul.f32 %v847, %v748
    %851 = vrot.lane.b32.xlu0 %v848, 64
    %v852 = vpop.permute.xlu0 %851
    %v854 = vmul.f32 %v847, %v852
    %856 = vrot.lane.b32.xlu0 %v854, 32
    %v857 = vpop.permute.xlu0 %856
    %v859 = vadd.f32 %v849, %v857
    %v860 = vtanh.pop %v859
    %862 = vrot.lane.b32.xlu0 %v860, 64
    %v863 = vpop.permute.xlu0 %862
    %v865 = vmul.f32 %v847, %v863
    %v866 = vperm.slane %v52, 0
    %869 = vrot.lane.b32.xlu0 %v865, 32
    %v870 = vpop.permute.xlu0 %869
    %v871 = vsel %vm53, %v870, 0
    %873 = vmatpush.msra.mxu0 0.0
    %874 = vmatpush.msra.mxu0 0.0
    %875 = vmatpush.msra.mxu0 0.0
    %876 = vmatpush.msra.mxu0 0.0
    %877 = vmatpush.msra.mxu0 0.0
    %878 = vmatpush.msra.mxu0 0.0
    %879 = vmatpush.msra.mxu0 0.0
    %880 = vmatpush.msra.mxu0 0.0
    %881 = vmatpush.msra.mxu0 0.0
    %882 = vmatpush.msra.mxu0 0.0
    %883 = vmatpush.msra.mxu0 0.0
    %884 = vmatpush.msra.mxu0 0.0
    %885 = vmatpush.msra.mxu0 %v51
    %886 = vmatpush.msra.mxu0 %v50
    %887 = vmatpush.msra.mxu0 %v49
    %888 = vmatpush.msra.mxu0 %v48
    %889 = vmatmul.f32.gmra.mxu0 %v871
    %v890 = vpop.f32.mrf.mxu0
    %v891 = vadd.f32 %v866, %v890
    %892 = vdwg.mxu0
    %v894 = vperm.slane %v793, 0
    %896 = vmatpush.msra.mxu0 0.0
    %897 = vmatpush.msra.mxu0 0.0
    %898 = vmatpush.msra.mxu0 0.0
    %899 = vmatpush.msra.mxu0 0.0
    %900 = vmatpush.msra.mxu0 0.0
    %901 = vmatpush.msra.mxu0 0.0
    %902 = vmatpush.msra.mxu0 0.0
    %903 = vmatpush.msra.mxu0 0.0
    %904 = vmatpush.msra.mxu0 0.0
    %905 = vmatpush.msra.mxu0 0.0
    %906 = vmatpush.msra.mxu0 0.0
    %907 = vmatpush.msra.mxu0 0.0
    %908 = vmatpush.msra.mxu0 %v785
    %909 = vmatpush.msra.mxu0 %v784
    %910 = vmatpush.msra.mxu0 %v783
    %911 = vmatpush.msra.mxu0 %v782
    %912 = vmatmul.f32.gmra.mxu0 %v871
    %v913 = vpop.f32.mrf.mxu0
    %v914 = vadd.f32 %v894, %v913
    %915 = vdwg.mxu0
    %v916 = vxor.u32 %v914, 2147483648
    %v917 = vmul.f32 %v916, 1.442695
    %v918 = vpow.pop %v917
    %v919 = vadd.f32 %v918, 1.0
    %v920 = vrcp.pop %v919
    %v921 = vmul.f32 %v919, %v920
    %v922 = vsub.f32 1.0, %v921
    %v923 = vmul.f32 %v920, %v922
    %v924 = vadd.f32 %v920, %v923
    %vm925 = vweird.f32 %v919
    %vm926 = vweird.f32 %v920
    %vm927 = vmor %vm925, %vm926
    %v928 = vsel %vm927, %v920, %v924
    %v929 = vand.u32 2147483647, %v919
    %vm930 = vcmp.eq.f32.partialorder %v929, 8.507059e+37
    %v931 = vand.u32 %v919, 2147483648
    %v932 = vor.u32 1.1754944e-38, %v931
    %v933 = vsel %vm930, %v932, %v928
    %v934 = vmul.f32 1.0, %v933
    %v935 = vtanh.pop %v914
    %v936 = vmul.f32 %v934, %v859
    %938 = vrot.lane.b32.xlu0 %v935, 64
    %v939 = vpop.permute.xlu0 %938
    %v941 = vmul.f32 %v934, %v939
    %943 = vrot.lane.b32.xlu0 %v941, 32
    %v944 = vpop.permute.xlu0 %943
    %v946 = vadd.f32 %v936, %v944
    %v947 = vtanh.pop %v946
    %949 = vrot.lane.b32.xlu0 %v947, 64
    %v950 = vpop.permute.xlu0 %949
    %v952 = vmul.f32 %v934, %v950
    %954 = vrot.lane.b32.xlu0 %v952, 32
    %v955 = vpop.permute.xlu0 %954
    %v956 = vsel %vm53, %v955, 0
    %958 = vmatpush.msra.mxu0 0.0
    %959 = vmatpush.msra.mxu0 0.0
    %960 = vmatpush.msra.mxu0 0.0
    %961 = vmatpush.msra.mxu0 0.0
    %962 = vmatpush.msra.mxu0 0.0
    %963 = vmatpush.msra.mxu0 0.0
    %964 = vmatpush.msra.mxu0 0.0
    %965 = vmatpush.msra.mxu0 0.0
    %966 = vmatpush.msra.mxu0 0.0
    %967 = vmatpush.msra.mxu0 0.0
    %968 = vmatpush.msra.mxu0 0.0
    %969 = vmatpush.msra.mxu0 0.0
    %970 = vmatpush.msra.mxu0 %v51
    %971 = vmatpush.msra.mxu0 %v50
    %972 = vmatpush.msra.mxu0 %v49
    %973 = vmatpush.msra.mxu0 %v48
    %974 = vmatmul.f32.gmra.mxu0 %v956
    %v975 = vpop.f32.mrf.mxu0
    %v976 = vadd.f32 %v866, %v975
    %977 = vdwg.mxu0
    %978 = vmatpush.msra.mxu0 0.0
    %979 = vmatpush.msra.mxu0 0.0
    %980 = vmatpush.msra.mxu0 0.0
    %981 = vmatpush.msra.mxu0 0.0
    %982 = vmatpush.msra.mxu0 0.0
    %983 = vmatpush.msra.mxu0 0.0
    %984 = vmatpush.msra.mxu0 0.0
    %985 = vmatpush.msra.mxu0 0.0
    %986 = vmatpush.msra.mxu0 0.0
    %987 = vmatpush.msra.mxu0 0.0
    %988 = vmatpush.msra.mxu0 0.0
    %989 = vmatpush.msra.mxu0 0.0
    %990 = vmatpush.msra.mxu0 %v785
    %991 = vmatpush.msra.mxu0 %v784
    %992 = vmatpush.msra.mxu0 %v783
    %993 = vmatpush.msra.mxu0 %v782
    %994 = vmatmul.f32.gmra.mxu0 %v956
    %v995 = vpop.f32.mrf.mxu0
    %v996 = vadd.f32 %v894, %v995
    %997 = vdwg.mxu0
    %v998 = vxor.u32 %v996, 2147483648
    %v999 = vmul.f32 %v998, 1.442695
    %v1000 = vpow.pop %v999
    %v1001 = vadd.f32 %v1000, 1.0
    %v1002 = vrcp.pop %v1001
    %v1003 = vmul.f32 %v1001, %v1002
    %v1004 = vsub.f32 1.0, %v1003
    %v1005 = vmul.f32 %v1002, %v1004
    %v1006 = vadd.f32 %v1002, %v1005
    %vm1007 = vweird.f32 %v1001
    %vm1008 = vweird.f32 %v1002
    %vm1009 = vmor %vm1007, %vm1008
    %v1010 = vsel %vm1009, %v1002, %v1006
    %v1011 = vand.u32 2147483647, %v1001
    %vm1012 = vcmp.eq.f32.partialorder %v1011, 8.507059e+37
    %v1013 = vand.u32 %v1001, 2147483648
    %v1014 = vor.u32 1.1754944e-38, %v1013
    %v1015 = vsel %vm1012, %v1014, %v1010
    %v1016 = vmul.f32 1.0, %v1015
    %v1017 = vtanh.pop %v996
    %v1018 = vmul.f32 %v1016, %v946
    %1020 = vrot.lane.b32.xlu0 %v1017, 64
    %v1021 = vpop.permute.xlu0 %1020
    %v1023 = vmul.f32 %v1016, %v1021
    %1025 = vrot.lane.b32.xlu0 %v1023, 32
    %v1026 = vpop.permute.xlu0 %1025
    %v1028 = vadd.f32 %v1018, %v1026
    %v1029 = vtanh.pop %v1028
    %1031 = vrot.lane.b32.xlu0 %v1029, 64
    %v1032 = vpop.permute.xlu0 %1031
    %v1034 = vmul.f32 %v1016, %v1032
    %1036 = vrot.lane.b32.xlu0 %v1034, 32
    %v1037 = vpop.permute.xlu0 %1036
    %v1038 = vsel %vm53, %v1037, 0
    %1040 = vmatpush.msra.mxu0 0.0
    %1041 = vmatpush.msra.mxu0 0.0
    %1042 = vmatpush.msra.mxu0 0.0
    %1043 = vmatpush.msra.mxu0 0.0
    %1044 = vmatpush.msra.mxu0 0.0
    %1045 = vmatpush.msra.mxu0 0.0
    %1046 = vmatpush.msra.mxu0 0.0
    %1047 = vmatpush.msra.mxu0 0.0
    %1048 = vmatpush.msra.mxu0 0.0
    %1049 = vmatpush.msra.mxu0 0.0
    %1050 = vmatpush.msra.mxu0 0.0
    %1051 = vmatpush.msra.mxu0 0.0
    %1052 = vmatpush.msra.mxu0 %v51
    %1053 = vmatpush.msra.mxu0 %v50
    %1054 = vmatpush.msra.mxu0 %v49
    %1055 = vmatpush.msra.mxu0 %v48
    %1056 = vmatmul.f32.gmra.mxu0 %v1038
    %v1057 = vpop.f32.mrf.mxu0
    %v1058 = vadd.f32 %v866, %v1057
    %1059 = vdwg.mxu0
    %1060 = vmatpush.msra.mxu0 0.0
    %1061 = vmatpush.msra.mxu0 0.0
    %1062 = vmatpush.msra.mxu0 0.0
    %1063 = vmatpush.msra.mxu0 0.0
    %1064 = vmatpush.msra.mxu0 0.0
    %1065 = vmatpush.msra.mxu0 0.0
    %1066 = vmatpush.msra.mxu0 0.0
    %1067 = vmatpush.msra.mxu0 0.0
    %1068 = vmatpush.msra.mxu0 0.0
    %1069 = vmatpush.msra.mxu0 0.0
    %1070 = vmatpush.msra.mxu0 0.0
    %1071 = vmatpush.msra.mxu0 0.0
    %1072 = vmatpush.msra.mxu0 %v785
    %1073 = vmatpush.msra.mxu0 %v784
    %1074 = vmatpush.msra.mxu0 %v783
    %1075 = vmatpush.msra.mxu0 %v782
    %1076 = vmatmul.f32.gmra.mxu0 %v1038
    %v1077 = vpop.f32.mrf.mxu0
    %v1078 = vadd.f32 %v894, %v1077
    %1079 = vdwg.mxu0
    %v1080 = vxor.u32 %v1078, 2147483648
    %v1081 = vmul.f32 %v1080, 1.442695
    %v1082 = vpow.pop %v1081
    %v1083 = vadd.f32 %v1082, 1.0
    %v1084 = vrcp.pop %v1083
    %v1085 = vmul.f32 %v1083, %v1084
    %v1086 = vsub.f32 1.0, %v1085
    %v1087 = vmul.f32 %v1084, %v1086
    %v1088 = vadd.f32 %v1084, %v1087
    %vm1089 = vweird.f32 %v1083
    %vm1090 = vweird.f32 %v1084
    %vm1091 = vmor %vm1089, %vm1090
    %v1092 = vsel %vm1091, %v1084, %v1088
    %v1093 = vand.u32 2147483647, %v1083
    %vm1094 = vcmp.eq.f32.partialorder %v1093, 8.507059e+37
    %v1095 = vand.u32 %v1083, 2147483648
    %v1096 = vor.u32 1.1754944e-38, %v1095
    %v1097 = vsel %vm1094, %v1096, %v1092
    %v1098 = vmul.f32 1.0, %v1097
    %v1099 = vtanh.pop %v1078
    %v1100 = vmul.f32 %v1098, %v1028
    %1102 = vrot.lane.b32.xlu0 %v1099, 64
    %v1103 = vpop.permute.xlu0 %1102
    %v1105 = vmul.f32 %v1098, %v1103
    %1107 = vrot.lane.b32.xlu0 %v1105, 32
    %v1108 = vpop.permute.xlu0 %1107
    %v1110 = vadd.f32 %v1100, %v1108
    %v1111 = vtanh.pop %v1110
    %1113 = vrot.lane.b32.xlu0 %v1111, 64
    %v1114 = vpop.permute.xlu0 %1113
    %v1116 = vmul.f32 %v1098, %v1114
    %1118 = vrot.lane.b32.xlu0 %v1116, 32
    %v1119 = vpop.permute.xlu0 %1118
    %v1120 = vsel %vm53, %v1119, 0
    %1122 = vmatpush.msra.mxu0 0.0
    %1123 = vmatpush.msra.mxu0 0.0
    %1124 = vmatpush.msra.mxu0 0.0
    %1125 = vmatpush.msra.mxu0 0.0
    %1126 = vmatpush.msra.mxu0 0.0
    %1127 = vmatpush.msra.mxu0 0.0
    %1128 = vmatpush.msra.mxu0 0.0
    %1129 = vmatpush.msra.mxu0 0.0
    %1130 = vmatpush.msra.mxu0 0.0
    %1131 = vmatpush.msra.mxu0 0.0
    %1132 = vmatpush.msra.mxu0 0.0
    %1133 = vmatpush.msra.mxu0 0.0
    %1134 = vmatpush.msra.mxu0 %v51
    %1135 = vmatpush.msra.mxu0 %v50
    %1136 = vmatpush.msra.mxu0 %v49
    %1137 = vmatpush.msra.mxu0 %v48
    %1138 = vmatmul.f32.gmra.mxu0 %v1120
    %v1139 = vpop.f32.mrf.mxu0
    %v1140 = vadd.f32 %v866, %v1139
    %1141 = vdwg.mxu0
    %1142 = vmatpush.msra.mxu0 0.0
    %1143 = vmatpush.msra.mxu0 0.0
    %1144 = vmatpush.msra.mxu0 0.0
    %1145 = vmatpush.msra.mxu0 0.0
    %1146 = vmatpush.msra.mxu0 0.0
    %1147 = vmatpush.msra.mxu0 0.0
    %1148 = vmatpush.msra.mxu0 0.0
    %1149 = vmatpush.msra.mxu0 0.0
    %1150 = vmatpush.msra.mxu0 0.0
    %1151 = vmatpush.msra.mxu0 0.0
    %1152 = vmatpush.msra.mxu0 0.0
    %1153 = vmatpush.msra.mxu0 0.0
    %1154 = vmatpush.msra.mxu0 %v785
    %1155 = vmatpush.msra.mxu0 %v784
    %1156 = vmatpush.msra.mxu0 %v783
    %1157 = vmatpush.msra.mxu0 %v782
    %1158 = vmatmul.f32.gmra.mxu0 %v1120
    %v1159 = vpop.f32.mrf.mxu0
    %v1160 = vadd.f32 %v894, %v1159
    %1161 = vdwg.mxu0
    %v1162 = vxor.u32 %v1160, 2147483648
    %v1163 = vmul.f32 %v1162, 1.442695
    %v1164 = vpow.pop %v1163
    %v1165 = vadd.f32 %v1164, 1.0
    %v1166 = vrcp.pop %v1165
    %v1167 = vmul.f32 %v1165, %v1166
    %v1168 = vsub.f32 1.0, %v1167
    %v1169 = vmul.f32 %v1166, %v1168
    %v1170 = vadd.f32 %v1166, %v1169
    %vm1171 = vweird.f32 %v1165
    %vm1172 = vweird.f32 %v1166
    %vm1173 = vmor %vm1171, %vm1172
    %v1174 = vsel %vm1173, %v1166, %v1170
    %v1175 = vand.u32 2147483647, %v1165
    %vm1176 = vcmp.eq.f32.partialorder %v1175, 8.507059e+37
    %v1177 = vand.u32 %v1165, 2147483648
    %v1178 = vor.u32 1.1754944e-38, %v1177
    %v1179 = vsel %vm1176, %v1178, %v1174
    %v1180 = vmul.f32 1.0, %v1179
    %v1181 = vtanh.pop %v1160
    %v1182 = vmul.f32 %v1180, %v1110
    %1184 = vrot.lane.b32.xlu0 %v1181, 64
    %v1185 = vpop.permute.xlu0 %1184
    %v1187 = vmul.f32 %v1180, %v1185
    %1189 = vrot.lane.b32.xlu0 %v1187, 32
    %v1190 = vpop.permute.xlu0 %1189
    %v1192 = vadd.f32 %v1182, %v1190
    %v1193 = vtanh.pop %v1192
    %1195 = vrot.lane.b32.xlu0 %v1193, 64
    %v1196 = vpop.permute.xlu0 %1195
    %v1198 = vmul.f32 %v1180, %v1196
    %1200 = vrot.lane.b32.xlu0 %v1198, 32
    %v1201 = vpop.permute.xlu0 %1200
    %v1202 = vsel %vm53, %v1201, 0
    %1204 = vmatpush.msra.mxu0 0.0
    %1205 = vmatpush.msra.mxu0 0.0
    %1206 = vmatpush.msra.mxu0 0.0
    %1207 = vmatpush.msra.mxu0 0.0
    %1208 = vmatpush.msra.mxu0 0.0
    %1209 = vmatpush.msra.mxu0 0.0
    %1210 = vmatpush.msra.mxu0 0.0
    %1211 = vmatpush.msra.mxu0 0.0
    %1212 = vmatpush.msra.mxu0 0.0
    %1213 = vmatpush.msra.mxu0 0.0
    %1214 = vmatpush.msra.mxu0 0.0
    %1215 = vmatpush.msra.mxu0 0.0
    %1216 = vmatpush.msra.mxu0 %v51
    %1217 = vmatpush.msra.mxu0 %v50
    %1218 = vmatpush.msra.mxu0 %v49
    %1219 = vmatpush.msra.mxu0 %v48
    %1220 = vmatmul.f32.gmra.mxu0 %v1202
    %v1221 = vpop.f32.mrf.mxu0
    %v1222 = vadd.f32 %v866, %v1221
    %1223 = vdwg.mxu0
    %1224 = vmatpush.msra.mxu0 0.0
    %1225 = vmatpush.msra.mxu0 0.0
    %1226 = vmatpush.msra.mxu0 0.0
    %1227 = vmatpush.msra.mxu0 0.0
    %1228 = vmatpush.msra.mxu0 0.0
    %1229 = vmatpush.msra.mxu0 0.0
    %1230 = vmatpush.msra.mxu0 0.0
    %1231 = vmatpush.msra.mxu0 0.0
    %1232 = vmatpush.msra.mxu0 0.0
    %1233 = vmatpush.msra.mxu0 0.0
    %1234 = vmatpush.msra.mxu0 0.0
    %1235 = vmatpush.msra.mxu0 0.0
    %1236 = vmatpush.msra.mxu0 %v785
    %1237 = vmatpush.msra.mxu0 %v784
    %1238 = vmatpush.msra.mxu0 %v783
    %1239 = vmatpush.msra.mxu0 %v782
    %1240 = vmatmul.f32.gmra.mxu0 %v1202
    %v1241 = vpop.f32.mrf.mxu0
    %v1242 = vadd.f32 %v894, %v1241
    %1243 = vdwg.mxu0
    %v1244 = vxor.u32 %v1242, 2147483648
    %v1245 = vmul.f32 %v1244, 1.442695
    %v1246 = vpow.pop %v1245
    %v1247 = vadd.f32 %v1246, 1.0
    %v1248 = vrcp.pop %v1247
    %v1249 = vmul.f32 %v1247, %v1248
    %v1250 = vsub.f32 1.0, %v1249
    %v1251 = vmul.f32 %v1248, %v1250
    %v1252 = vadd.f32 %v1248, %v1251
    %vm1253 = vweird.f32 %v1247
    %vm1254 = vweird.f32 %v1248
    %vm1255 = vmor %vm1253, %vm1254
    %v1256 = vsel %vm1255, %v1248, %v1252
    %v1257 = vand.u32 2147483647, %v1247
    %vm1258 = vcmp.eq.f32.partialorder %v1257, 8.507059e+37
    %v1259 = vand.u32 %v1247, 2147483648
    %v1260 = vor.u32 1.1754944e-38, %v1259
    %v1261 = vsel %vm1258, %v1260, %v1256
    %v1262 = vmul.f32 1.0, %v1261
    %v1263 = vtanh.pop %v1242
    %v1264 = vmul.f32 %v1262, %v1192
    %1266 = vrot.lane.b32.xlu0 %v1263, 64
    %v1267 = vpop.permute.xlu0 %1266
    %v1269 = vmul.f32 %v1262, %v1267
    %1271 = vrot.lane.b32.xlu0 %v1269, 32
    %v1272 = vpop.permute.xlu0 %1271
    %v1274 = vadd.f32 %v1264, %v1272
    %v1275 = vtanh.pop %v1274
    %1277 = vrot.lane.b32.xlu0 %v1275, 64
    %v1278 = vpop.permute.xlu0 %1277
    %v1280 = vmul.f32 %v1262, %v1278
    %1282 = vrot.lane.b32.xlu0 %v1280, 32
    %v1283 = vpop.permute.xlu0 %1282
    %v1284 = vsel %vm53, %v1283, 0
    %1286 = vmatpush.msra.mxu0 0.0
    %1287 = vmatpush.msra.mxu0 0.0
    %1288 = vmatpush.msra.mxu0 0.0
    %1289 = vmatpush.msra.mxu0 0.0
    %1290 = vmatpush.msra.mxu0 0.0
    %1291 = vmatpush.msra.mxu0 0.0
    %1292 = vmatpush.msra.mxu0 0.0
    %1293 = vmatpush.msra.mxu0 0.0
    %1294 = vmatpush.msra.mxu0 0.0
    %1295 = vmatpush.msra.mxu0 0.0
    %1296 = vmatpush.msra.mxu0 0.0
    %1297 = vmatpush.msra.mxu0 0.0
    %1298 = vmatpush.msra.mxu0 %v51
    %1299 = vmatpush.msra.mxu0 %v50
    %1300 = vmatpush.msra.mxu0 %v49
    %1301 = vmatpush.msra.mxu0 %v48
    %1302 = vmatmul.f32.gmra.mxu0 %v1284
    %v1303 = vpop.f32.mrf.mxu0
    %v1304 = vadd.f32 %v866, %v1303
    %1305 = vdwg.mxu0
    %1306 = vmatpush.msra.mxu0 0.0
    %1307 = vmatpush.msra.mxu0 0.0
    %1308 = vmatpush.msra.mxu0 0.0
    %1309 = vmatpush.msra.mxu0 0.0
    %1310 = vmatpush.msra.mxu0 0.0
    %1311 = vmatpush.msra.mxu0 0.0
    %1312 = vmatpush.msra.mxu0 0.0
    %1313 = vmatpush.msra.mxu0 0.0
    %1314 = vmatpush.msra.mxu0 0.0
    %1315 = vmatpush.msra.mxu0 0.0
    %1316 = vmatpush.msra.mxu0 0.0
    %1317 = vmatpush.msra.mxu0 0.0
    %1318 = vmatpush.msra.mxu0 %v785
    %1319 = vmatpush.msra.mxu0 %v784
    %1320 = vmatpush.msra.mxu0 %v783
    %1321 = vmatpush.msra.mxu0 %v782
    %1322 = vmatmul.f32.gmra.mxu0 %v1284
    %v1323 = vpop.f32.mrf.mxu0
    %v1324 = vadd.f32 %v894, %v1323
    %1325 = vdwg.mxu0
    %v1326 = vxor.u32 %v1324, 2147483648
    %v1327 = vmul.f32 %v1326, 1.442695
    %v1328 = vpow.pop %v1327
    %v1329 = vadd.f32 %v1328, 1.0
    %v1330 = vrcp.pop %v1329
    %v1331 = vmul.f32 %v1329, %v1330
    %v1332 = vsub.f32 1.0, %v1331
    %v1333 = vmul.f32 %v1330, %v1332
    %v1334 = vadd.f32 %v1330, %v1333
    %vm1335 = vweird.f32 %v1329
    %vm1336 = vweird.f32 %v1330
    %vm1337 = vmor %vm1335, %vm1336
    %v1338 = vsel %vm1337, %v1330, %v1334
    %v1339 = vand.u32 2147483647, %v1329
    %vm1340 = vcmp.eq.f32.partialorder %v1339, 8.507059e+37
    %v1341 = vand.u32 %v1329, 2147483648
    %v1342 = vor.u32 1.1754944e-38, %v1341
    %v1343 = vsel %vm1340, %v1342, %v1338
    %v1344 = vmul.f32 1.0, %v1343
    %v1345 = vtanh.pop %v1324
    %v1346 = vmul.f32 %v1344, %v1274
    %1348 = vrot.lane.b32.xlu0 %v1345, 64
    %v1349 = vpop.permute.xlu0 %1348
    %v1351 = vmul.f32 %v1344, %v1349
    %1353 = vrot.lane.b32.xlu0 %v1351, 32
    %v1354 = vpop.permute.xlu0 %1353
    %v1356 = vadd.f32 %v1346, %v1354
    %v1357 = vtanh.pop %v1356
    %1359 = vrot.lane.b32.xlu0 %v1357, 64
    %v1360 = vpop.permute.xlu0 %1359
    %v1362 = vmul.f32 %v1344, %v1360
    %1364 = vrot.lane.b32.xlu0 %v1362, 32
    %v1365 = vpop.permute.xlu0 %1364
    %v1366 = vsel %vm53, %v1365, 0
    %1368 = vmatpush.msra.mxu0 0.0
    %1369 = vmatpush.msra.mxu0 0.0
    %1370 = vmatpush.msra.mxu0 0.0
    %1371 = vmatpush.msra.mxu0 0.0
    %1372 = vmatpush.msra.mxu0 0.0
    %1373 = vmatpush.msra.mxu0 0.0
    %1374 = vmatpush.msra.mxu0 0.0
    %1375 = vmatpush.msra.mxu0 0.0
    %1376 = vmatpush.msra.mxu0 0.0
    %1377 = vmatpush.msra.mxu0 0.0
    %1378 = vmatpush.msra.mxu0 0.0
    %1379 = vmatpush.msra.mxu0 0.0
    %1380 = vmatpush.msra.mxu0 %v51
    %1381 = vmatpush.msra.mxu0 %v50
    %1382 = vmatpush.msra.mxu0 %v49
    %1383 = vmatpush.msra.mxu0 %v48
    %1384 = vmatmul.f32.gmra.mxu0 %v1366
    %v1385 = vpop.f32.mrf.mxu0
    %v1386 = vadd.f32 %v866, %v1385
    %1387 = vdwg.mxu0
    %1388 = vmatpush.msra.mxu0 0.0
    %1389 = vmatpush.msra.mxu0 0.0
    %1390 = vmatpush.msra.mxu0 0.0
    %1391 = vmatpush.msra.mxu0 0.0
    %1392 = vmatpush.msra.mxu0 0.0
    %1393 = vmatpush.msra.mxu0 0.0
    %1394 = vmatpush.msra.mxu0 0.0
    %1395 = vmatpush.msra.mxu0 0.0
    %1396 = vmatpush.msra.mxu0 0.0
    %1397 = vmatpush.msra.mxu0 0.0
    %1398 = vmatpush.msra.mxu0 0.0
    %1399 = vmatpush.msra.mxu0 0.0
    %1400 = vmatpush.msra.mxu0 %v785
    %1401 = vmatpush.msra.mxu0 %v784
    %1402 = vmatpush.msra.mxu0 %v783
    %1403 = vmatpush.msra.mxu0 %v782
    %1404 = vmatmul.f32.gmra.mxu0 %v1366
    %v1405 = vpop.f32.mrf.mxu0
    %v1406 = vadd.f32 %v894, %v1405
    %1407 = vdwg.mxu0
    %v1408 = vxor.u32 %v1406, 2147483648
    %v1409 = vmul.f32 %v1408, 1.442695
    %v1410 = vpow.pop %v1409
    %v1411 = vadd.f32 %v1410, 1.0
    %v1412 = vrcp.pop %v1411
    %v1413 = vmul.f32 %v1411, %v1412
    %v1414 = vsub.f32 1.0, %v1413
    %v1415 = vmul.f32 %v1412, %v1414
    %v1416 = vadd.f32 %v1412, %v1415
    %vm1417 = vweird.f32 %v1411
    %vm1418 = vweird.f32 %v1412
    %vm1419 = vmor %vm1417, %vm1418
    %v1420 = vsel %vm1419, %v1412, %v1416
    %v1421 = vand.u32 2147483647, %v1411
    %vm1422 = vcmp.eq.f32.partialorder %v1421, 8.507059e+37
    %v1423 = vand.u32 %v1411, 2147483648
    %v1424 = vor.u32 1.1754944e-38, %v1423
    %v1425 = vsel %vm1422, %v1424, %v1420
    %v1426 = vmul.f32 1.0, %v1425
    %v1427 = vtanh.pop %v1406
    %v1428 = vmul.f32 %v1426, %v1356
    %1430 = vrot.lane.b32.xlu0 %v1427, 64
    %v1431 = vpop.permute.xlu0 %1430
    %v1433 = vmul.f32 %v1426, %v1431
    %1435 = vrot.lane.b32.xlu0 %v1433, 32
    %v1436 = vpop.permute.xlu0 %1435
    %v1438 = vadd.f32 %v1428, %v1436
    %v1439 = vtanh.pop %v1438
    %1441 = vrot.lane.b32.xlu0 %v1439, 64
    %v1442 = vpop.permute.xlu0 %1441
    %v1444 = vmul.f32 %v1426, %v1442
    %1446 = vrot.lane.b32.xlu0 %v1444, 32
    %v1447 = vpop.permute.xlu0 %1446
    %v1448 = vsel %vm53, %v1447, 0
    %1450 = vmatpush.msra.mxu0 0.0
    %1451 = vmatpush.msra.mxu0 0.0
    %1452 = vmatpush.msra.mxu0 0.0
    %1453 = vmatpush.msra.mxu0 0.0
    %1454 = vmatpush.msra.mxu0 0.0
    %1455 = vmatpush.msra.mxu0 0.0
    %1456 = vmatpush.msra.mxu0 0.0
    %1457 = vmatpush.msra.mxu0 0.0
    %1458 = vmatpush.msra.mxu0 0.0
    %1459 = vmatpush.msra.mxu0 0.0
    %1460 = vmatpush.msra.mxu0 0.0
    %1461 = vmatpush.msra.mxu0 0.0
    %1462 = vmatpush.msra.mxu0 %v51
    %1463 = vmatpush.msra.mxu0 %v50
    %1464 = vmatpush.msra.mxu0 %v49
    %1465 = vmatpush.msra.mxu0 %v48
    %1466 = vmatmul.f32.gmra.mxu0 %v1448
    %v1467 = vpop.f32.mrf.mxu0
    %v1468 = vadd.f32 %v866, %v1467
    %1469 = vdwg.mxu0
    %1470 = vmatpush.msra.mxu0 0.0
    %1471 = vmatpush.msra.mxu0 0.0
    %1472 = vmatpush.msra.mxu0 0.0
    %1473 = vmatpush.msra.mxu0 0.0
    %1474 = vmatpush.msra.mxu0 0.0
    %1475 = vmatpush.msra.mxu0 0.0
    %1476 = vmatpush.msra.mxu0 0.0
    %1477 = vmatpush.msra.mxu0 0.0
    %1478 = vmatpush.msra.mxu0 0.0
    %1479 = vmatpush.msra.mxu0 0.0
    %1480 = vmatpush.msra.mxu0 0.0
    %1481 = vmatpush.msra.mxu0 0.0
    %1482 = vmatpush.msra.mxu0 %v785
    %1483 = vmatpush.msra.mxu0 %v784
    %1484 = vmatpush.msra.mxu0 %v783
    %1485 = vmatpush.msra.mxu0 %v782
    %1486 = vmatmul.f32.gmra.mxu0 %v1448
    %v1487 = vpop.f32.mrf.mxu0
    %v1488 = vadd.f32 %v894, %v1487
    %1489 = vdwg.mxu0
    %v1490 = vxor.u32 %v1488, 2147483648
    %v1491 = vmul.f32 %v1490, 1.442695
    %v1492 = vpow.pop %v1491
    %v1493 = vadd.f32 %v1492, 1.0
    %v1494 = vrcp.pop %v1493
    %v1495 = vmul.f32 %v1493, %v1494
    %v1496 = vsub.f32 1.0, %v1495
    %v1497 = vmul.f32 %v1494, %v1496
    %v1498 = vadd.f32 %v1494, %v1497
    %vm1499 = vweird.f32 %v1493
    %vm1500 = vweird.f32 %v1494
    %vm1501 = vmor %vm1499, %vm1500
    %v1502 = vsel %vm1501, %v1494, %v1498
    %v1503 = vand.u32 2147483647, %v1493
    %vm1504 = vcmp.eq.f32.partialorder %v1503, 8.507059e+37
    %v1505 = vand.u32 %v1493, 2147483648
    %v1506 = vor.u32 1.1754944e-38, %v1505
    %v1507 = vsel %vm1504, %v1506, %v1502
    %v1508 = vmul.f32 1.0, %v1507
    %v1509 = vtanh.pop %v1488
    %v1510 = vmul.f32 %v1508, %v1438
    %1512 = vrot.lane.b32.xlu0 %v1509, 64
    %v1513 = vpop.permute.xlu0 %1512
    %v1515 = vmul.f32 %v1508, %v1513
    %1517 = vrot.lane.b32.xlu0 %v1515, 32
    %v1518 = vpop.permute.xlu0 %1517
    %v1520 = vadd.f32 %v1510, %v1518
    %v1521 = vtanh.pop %v1520
    %1523 = vrot.lane.b32.xlu0 %v1521, 64
    %v1524 = vpop.permute.xlu0 %1523
    %v1526 = vmul.f32 %v1508, %v1524
    %1528 = vrot.lane.b32.xlu0 %v1526, 32
    %v1529 = vpop.permute.xlu0 %1528
    %v1530 = vsel %vm53, %v1529, 0
    %1532 = vmatpush.msra.mxu0 0.0
    %1533 = vmatpush.msra.mxu0 0.0
    %1534 = vmatpush.msra.mxu0 0.0
    %1535 = vmatpush.msra.mxu0 0.0
    %1536 = vmatpush.msra.mxu0 0.0
    %1537 = vmatpush.msra.mxu0 0.0
    %1538 = vmatpush.msra.mxu0 0.0
    %1539 = vmatpush.msra.mxu0 0.0
    %1540 = vmatpush.msra.mxu0 0.0
    %1541 = vmatpush.msra.mxu0 0.0
    %1542 = vmatpush.msra.mxu0 0.0
    %1543 = vmatpush.msra.mxu0 0.0
    %1544 = vmatpush.msra.mxu0 %v51
    %1545 = vmatpush.msra.mxu0 %v50
    %1546 = vmatpush.msra.mxu0 %v49
    %1547 = vmatpush.msra.mxu0 %v48
    %1548 = vmatmul.f32.gmra.mxu0 %v1530
    %v1549 = vpop.f32.mrf.mxu0
    %v1550 = vadd.f32 %v866, %v1549
    %1551 = vdwg.mxu0
    %1552 = vmatpush.msra.mxu0 0.0
    %1553 = vmatpush.msra.mxu0 0.0
    %1554 = vmatpush.msra.mxu0 0.0
    %1555 = vmatpush.msra.mxu0 0.0
    %1556 = vmatpush.msra.mxu0 0.0
    %1557 = vmatpush.msra.mxu0 0.0
    %1558 = vmatpush.msra.mxu0 0.0
    %1559 = vmatpush.msra.mxu0 0.0
    %1560 = vmatpush.msra.mxu0 0.0
    %1561 = vmatpush.msra.mxu0 0.0
    %1562 = vmatpush.msra.mxu0 0.0
    %1563 = vmatpush.msra.mxu0 0.0
    %1564 = vmatpush.msra.mxu0 %v785
    %1565 = vmatpush.msra.mxu0 %v784
    %1566 = vmatpush.msra.mxu0 %v783
    %1567 = vmatpush.msra.mxu0 %v782
    %1568 = vmatmul.f32.gmra.mxu0 %v1530
    %v1569 = vpop.f32.mrf.mxu0
    %v1570 = vadd.f32 %v894, %v1569
    %1571 = vdwg.mxu0
    %v1572 = vxor.u32 %v1570, 2147483648
    %v1573 = vmul.f32 %v1572, 1.442695
    %v1574 = vpow.pop %v1573
    %v1575 = vadd.f32 %v1574, 1.0
    %v1576 = vrcp.pop %v1575
    %v1577 = vmul.f32 %v1575, %v1576
    %v1578 = vsub.f32 1.0, %v1577
    %v1579 = vmul.f32 %v1576, %v1578
    %v1580 = vadd.f32 %v1576, %v1579
    %vm1581 = vweird.f32 %v1575
    %vm1582 = vweird.f32 %v1576
    %vm1583 = vmor %vm1581, %vm1582
    %v1584 = vsel %vm1583, %v1576, %v1580
    %v1585 = vand.u32 2147483647, %v1575
    %vm1586 = vcmp.eq.f32.partialorder %v1585, 8.507059e+37
    %v1587 = vand.u32 %v1575, 2147483648
    %v1588 = vor.u32 1.1754944e-38, %v1587
    %v1589 = vsel %vm1586, %v1588, %v1584
    %v1590 = vmul.f32 1.0, %v1589
    %v1591 = vtanh.pop %v1570
    %v1592 = vmul.f32 %v1590, %v1520
    %1594 = vrot.lane.b32.xlu0 %v1591, 64
    %v1595 = vpop.permute.xlu0 %1594
    %v1597 = vmul.f32 %v1590, %v1595
    %1599 = vrot.lane.b32.xlu0 %v1597, 32
    %v1600 = vpop.permute.xlu0 %1599
    %v1602 = vadd.f32 %v1592, %v1600
    %v1603 = vtanh.pop %v1602
    %1605 = vrot.lane.b32.xlu0 %v1603, 64
    %v1606 = vpop.permute.xlu0 %1605
    %v1608 = vmul.f32 %v1590, %v1606
    %1610 = vrot.lane.b32.xlu0 %v1608, 32
    %v1611 = vpop.permute.xlu0 %1610
    %v1612 = vsel %vm53, %v1611, 0
    %1614 = vmatpush.msra.mxu0 0.0
    %1615 = vmatpush.msra.mxu0 0.0
    %1616 = vmatpush.msra.mxu0 0.0
    %1617 = vmatpush.msra.mxu0 0.0
    %1618 = vmatpush.msra.mxu0 0.0
    %1619 = vmatpush.msra.mxu0 0.0
    %1620 = vmatpush.msra.mxu0 0.0
    %1621 = vmatpush.msra.mxu0 0.0
    %1622 = vmatpush.msra.mxu0 0.0
    %1623 = vmatpush.msra.mxu0 0.0
    %1624 = vmatpush.msra.mxu0 0.0
    %1625 = vmatpush.msra.mxu0 0.0
    %1626 = vmatpush.msra.mxu0 %v51
    %1627 = vmatpush.msra.mxu0 %v50
    %1628 = vmatpush.msra.mxu0 %v49
    %1629 = vmatpush.msra.mxu0 %v48
    %1630 = vmatmul.f32.gmra.mxu0 %v1612
    %v1631 = vpop.f32.mrf.mxu0
    %v1632 = vadd.f32 %v866, %v1631
    %1633 = vdwg.mxu0
    %1634 = vmatpush.msra.mxu0 0.0
    %1635 = vmatpush.msra.mxu0 0.0
    %1636 = vmatpush.msra.mxu0 0.0
    %1637 = vmatpush.msra.mxu0 0.0
    %1638 = vmatpush.msra.mxu0 0.0
    %1639 = vmatpush.msra.mxu0 0.0
    %1640 = vmatpush.msra.mxu0 0.0
    %1641 = vmatpush.msra.mxu0 0.0
    %1642 = vmatpush.msra.mxu0 0.0
    %1643 = vmatpush.msra.mxu0 0.0
    %1644 = vmatpush.msra.mxu0 0.0
    %1645 = vmatpush.msra.mxu0 0.0
    %1646 = vmatpush.msra.mxu0 %v785
    %1647 = vmatpush.msra.mxu0 %v784
    %1648 = vmatpush.msra.mxu0 %v783
    %1649 = vmatpush.msra.mxu0 %v782
    %1650 = vmatmul.f32.gmra.mxu0 %v1612
    %v1651 = vpop.f32.mrf.mxu0
    %v1652 = vadd.f32 %v894, %v1651
    %1653 = vdwg.mxu0
    %v1654 = vxor.u32 %v1652, 2147483648
    %v1655 = vmul.f32 %v1654, 1.442695
    %v1656 = vpow.pop %v1655
    %v1657 = vadd.f32 %v1656, 1.0
    %v1658 = vrcp.pop %v1657
    %v1659 = vmul.f32 %v1657, %v1658
    %v1660 = vsub.f32 1.0, %v1659
    %v1661 = vmul.f32 %v1658, %v1660
    %v1662 = vadd.f32 %v1658, %v1661
    %vm1663 = vweird.f32 %v1657
    %vm1664 = vweird.f32 %v1658
    %vm1665 = vmor %vm1663, %vm1664
    %v1666 = vsel %vm1665, %v1658, %v1662
    %v1667 = vand.u32 2147483647, %v1657
    %vm1668 = vcmp.eq.f32.partialorder %v1667, 8.507059e+37
    %v1669 = vand.u32 %v1657, 2147483648
    %v1670 = vor.u32 1.1754944e-38, %v1669
    %v1671 = vsel %vm1668, %v1670, %v1666
    %v1672 = vmul.f32 1.0, %v1671
    %v1673 = vtanh.pop %v1652
    %v1674 = vmul.f32 %v1672, %v1602
    %1676 = vrot.lane.b32.xlu0 %v1673, 64
    %v1677 = vpop.permute.xlu0 %1676
    %v1679 = vmul.f32 %v1672, %v1677
    %1681 = vrot.lane.b32.xlu0 %v1679, 32
    %v1682 = vpop.permute.xlu0 %1681
    %v1684 = vadd.f32 %v1674, %v1682
    %v1685 = vtanh.pop %v1684
    %1687 = vrot.lane.b32.xlu0 %v1685, 64
    %v1688 = vpop.permute.xlu0 %1687
    %v1690 = vmul.f32 %v1672, %v1688
    %1692 = vrot.lane.b32.xlu0 %v1690, 32
    %v1693 = vpop.permute.xlu0 %1692
    %v1694 = vsel %vm53, %v1693, 0
    %1696 = vmatpush.msra.mxu0 0.0
    %1697 = vmatpush.msra.mxu0 0.0
    %1698 = vmatpush.msra.mxu0 0.0
    %1699 = vmatpush.msra.mxu0 0.0
    %1700 = vmatpush.msra.mxu0 0.0
    %1701 = vmatpush.msra.mxu0 0.0
    %1702 = vmatpush.msra.mxu0 0.0
    %1703 = vmatpush.msra.mxu0 0.0
    %1704 = vmatpush.msra.mxu0 0.0
    %1705 = vmatpush.msra.mxu0 0.0
    %1706 = vmatpush.msra.mxu0 0.0
    %1707 = vmatpush.msra.mxu0 0.0
    %1708 = vmatpush.msra.mxu0 %v51
    %1709 = vmatpush.msra.mxu0 %v50
    %1710 = vmatpush.msra.mxu0 %v49
    %1711 = vmatpush.msra.mxu0 %v48
    %1712 = vmatmul.f32.gmra.mxu0 %v1694
    %v1713 = vpop.f32.mrf.mxu0
    %v1714 = vadd.f32 %v866, %v1713
    %1715 = vdwg.mxu0
    %1716 = vmatpush.msra.mxu0 0.0
    %1717 = vmatpush.msra.mxu0 0.0
    %1718 = vmatpush.msra.mxu0 0.0
    %1719 = vmatpush.msra.mxu0 0.0
    %1720 = vmatpush.msra.mxu0 0.0
    %1721 = vmatpush.msra.mxu0 0.0
    %1722 = vmatpush.msra.mxu0 0.0
    %1723 = vmatpush.msra.mxu0 0.0
    %1724 = vmatpush.msra.mxu0 0.0
    %1725 = vmatpush.msra.mxu0 0.0
    %1726 = vmatpush.msra.mxu0 0.0
    %1727 = vmatpush.msra.mxu0 0.0
    %1728 = vmatpush.msra.mxu0 %v785
    %1729 = vmatpush.msra.mxu0 %v784
    %1730 = vmatpush.msra.mxu0 %v783
    %1731 = vmatpush.msra.mxu0 %v782
    %1732 = vmatmul.f32.gmra.mxu0 %v1694
    %v1733 = vpop.f32.mrf.mxu0
    %v1734 = vadd.f32 %v894, %v1733
    %1735 = vdwg.mxu0
    %v1736 = vxor.u32 %v1734, 2147483648
    %v1737 = vmul.f32 %v1736, 1.442695
    %v1738 = vpow.pop %v1737
    %v1739 = vadd.f32 %v1738, 1.0
    %v1740 = vrcp.pop %v1739
    %v1741 = vmul.f32 %v1739, %v1740
    %v1742 = vsub.f32 1.0, %v1741
    %v1743 = vmul.f32 %v1740, %v1742
    %v1744 = vadd.f32 %v1740, %v1743
    %vm1745 = vweird.f32 %v1739
    %vm1746 = vweird.f32 %v1740
    %vm1747 = vmor %vm1745, %vm1746
    %v1748 = vsel %vm1747, %v1740, %v1744
    %v1749 = vand.u32 2147483647, %v1739
    %vm1750 = vcmp.eq.f32.partialorder %v1749, 8.507059e+37
    %v1751 = vand.u32 %v1739, 2147483648
    %v1752 = vor.u32 1.1754944e-38, %v1751
    %v1753 = vsel %vm1750, %v1752, %v1748
    %v1754 = vmul.f32 1.0, %v1753
    %v1755 = vtanh.pop %v1734
    %v1756 = vmul.f32 %v1754, %v1684
    %1758 = vrot.lane.b32.xlu0 %v1755, 64
    %v1759 = vpop.permute.xlu0 %1758
    %v1761 = vmul.f32 %v1754, %v1759
    %1763 = vrot.lane.b32.xlu0 %v1761, 32
    %v1764 = vpop.permute.xlu0 %1763
    %v1766 = vadd.f32 %v1756, %v1764
    %v1767 = vtanh.pop %v1766
    %1769 = vrot.lane.b32.xlu0 %v1767, 64
    %v1770 = vpop.permute.xlu0 %1769
    %v1772 = vmul.f32 %v1754, %v1770
    %1774 = vrot.lane.b32.xlu0 %v1772, 32
    %v1775 = vpop.permute.xlu0 %1774
    %v1776 = vsel %vm53, %v1775, 0
    %1778 = vmatpush.msra.mxu0 0.0
    %1779 = vmatpush.msra.mxu0 0.0
    %1780 = vmatpush.msra.mxu0 0.0
    %1781 = vmatpush.msra.mxu0 0.0
    %1782 = vmatpush.msra.mxu0 0.0
    %1783 = vmatpush.msra.mxu0 0.0
    %1784 = vmatpush.msra.mxu0 0.0
    %1785 = vmatpush.msra.mxu0 0.0
    %1786 = vmatpush.msra.mxu0 0.0
    %1787 = vmatpush.msra.mxu0 0.0
    %1788 = vmatpush.msra.mxu0 0.0
    %1789 = vmatpush.msra.mxu0 0.0
    %1790 = vmatpush.msra.mxu0 %v51
    %1791 = vmatpush.msra.mxu0 %v50
    %1792 = vmatpush.msra.mxu0 %v49
    %1793 = vmatpush.msra.mxu0 %v48
    %1794 = vmatmul.f32.gmra.mxu0 %v1776
    %v1795 = vpop.f32.mrf.mxu0
    %v1796 = vadd.f32 %v866, %v1795
    %1797 = vdwg.mxu0
    %1799 = vrot.lane.b32.xlu0 %v976, 1
    %v1800 = vpop.permute.xlu0 %1799
    %1803 = vrot.lane.b32.xlu0 %v1058, 2
    %v1804 = vpop.permute.xlu0 %1803
    %1807 = vrot.lane.b32.xlu0 %v1140, 3
    %v1808 = vpop.permute.xlu0 %1807
    %1811 = vrot.lane.b32.xlu0 %v1222, 4
    %v1812 = vpop.permute.xlu0 %1811
    %1815 = vrot.lane.b32.xlu0 %v1304, 5
    %v1816 = vpop.permute.xlu0 %1815
    %1819 = vrot.lane.b32.xlu0 %v1386, 6
    %v1820 = vpop.permute.xlu0 %1819
    %1823 = vrot.lane.b32.xlu0 %v1468, 7
    %v1824 = vpop.permute.xlu0 %1823
    %1827 = vrot.lane.b32.xlu0 %v1550, 8
    %v1828 = vpop.permute.xlu0 %1827
    %1831 = vrot.lane.b32.xlu0 %v1632, 9
    %v1832 = vpop.permute.xlu0 %1831
    %1835 = vrot.lane.b32.xlu0 %v1714, 10
    %v1836 = vpop.permute.xlu0 %1835
    %1839 = vrot.lane.b32.xlu0 %v1796, 11
    %v1840 = vpop.permute.xlu0 %1839
    %vm1842 = vcmask 7168
    %v1843 = vsel %vm1842, %v891, %v1800
    %vm1844 = vcmask 15360
    %v1845 = vsel %vm1844, %v1843, %v1804
    %vm1846 = vcmask 23552
    %v1847 = vsel %vm1846, %v1845, %v1808
    %v1848 = vsel %vm77, %v1847, %v1812
    %vm1849 = vcmask 39936
    %v1850 = vsel %vm1849, %v1848, %v1816
    %vm1851 = vcmask 48128
    %v1852 = vsel %vm1851, %v1850, %v1820
    %vm1853 = vcmask 56320
    %v1854 = vsel %vm1853, %v1852, %v1824
    %vm1855 = vcmask 64512
    %v1856 = vsel %vm1855, %v1854, %v1828
    %vm1857 = vcmask 72704
    %v1858 = vsel %vm1857, %v1856, %v1832
    %vm1859 = vcmask 80896
    %v1860 = vsel %vm1859, %v1858, %v1836
    %vm1861 = vcmask 89088
    %v1862 = vsel %vm1861, %v1860, %v1840
    %vm1863 = vcmask 91136
    %1864 = vst.msk [vmem:[#allocation3] sm:$0x3] %vm1863, %v1862
    // Predicated region
    $region38: #{model_forward.1} parent=1 // pred_check
      _
    $region39: #{model_forward.1} parent=1 // pred_check_branch
      %1866 = sbr.rel (0) target = $region41
    $region40: #{model_forward.1} parent=1 // pred_region
      %1868 = vsyncadd [#allocation4], 0
      %s1870 = sshll.u32 [#allocation3], 4
      %s1871 = int_to_ptr.vmem [resolvable:$true] %s1870
      %s1872 = sshll.u32 %s9, 4
      %s1873 = int_to_ptr.hbm [resolvable:$true] %s1872
      %1875 = dma.vmem_to_hbm [thread:$0]  %s1871, 32, %s1873, [#allocation4]
    $region41: #{model_forward.1} parent=1 // pred_fallthru
      _
    // Predicated region
    $region42: #{model_forward.1} parent=1 // pred_check
      _
    $region43: #{model_forward.1} parent=1 // pred_check_branch
      %1877 = sbr.rel (0) target = $region45
    $region44: #{model_forward.1} parent=1 // pred_region
      %1879 = dma.done [#allocation4], 32
    $region45: #{model_forward.1} parent=1 // pred_fallthru
      _
    %1880 = vsyncpa [#allocation4], 1

</llo_original>
